<compile_context>
chip_gen: v5e
topology: v5e:2x2
jax: 0.10.0
libtpu: 0.0.40
codegen_flags: <defaults>
</compile_context>

<pallas_src>
import functools

import jax
import jax.numpy as jnp
import numpy as np
from jax.experimental import pallas as pl
from jax.experimental.pallas import tpu as pltpu


# ----------------------------------------------------------------------------
# Fully-fused kernel: n_layers of bi-LSTM + final Linear(2H -> 1)
# ----------------------------------------------------------------------------
def _make_bilstm_head_kernel(n_layers, T, B, H):
    """Builds the kernel body.

    Ref layout (positional):
      xs_ref                     (T*B, E)    time-major flattened input
      per layer l: wa_l          (Din_l, 8H) hoisted input-proj weight ("same-step" rows)
                   wb_l          (Din_l, 8H) hoisted input-proj weight ("reversed-step" rows)
                   whh_l         (2H, 8H)    block-diag recurrent weight
                   b_l           (1, 8H)     fused biases (b_ih + b_hh, both directions)
      wlin_ref                   (1, 2H)
      blin_ref                   (1, 1)
      out_ref                    (B, 1)
      h_scr                      (T*B, 2H)   VMEM scratch (only if n_layers > 1)

    Gate column order (8H): [ i_f i_b | f_f f_b | o_f o_b | g_f g_b ].
    """

    def kernel(xs_ref, *refs):
        n_w = 4 * n_layers
        layer_refs = refs[:n_w]
        wlin_ref = refs[n_w]
        blin_ref = refs[n_w + 1]
        out_ref = refs[n_w + 2]
        h_scr = refs[n_w + 3] if n_layers > 1 else None

        # U[s*B:(s+1)*B, :] is the (permuted) layer input block for step s.
        U = xs_ref[...]
        h = None
        h_first = None

        for layer in range(n_layers):
            wa = layer_refs[4 * layer][...]
            wb = layer_refs[4 * layer + 1][...]
            whh = layer_refs[4 * layer + 2][...]
            b = layer_refs[4 * layer + 3][...]

            # Hoisted input projection (one batched matmul per direction),
            # bias folded in.  P is consumed at step s, Q at step T-1-s.
            P = jnp.dot(U, wa, preferred_element_type=jnp.float32) + b
            Q = jnp.dot(U, wb, preferred_element_type=jnp.float32)

            h = jnp.zeros((B, 2 * H), jnp.float32)
            c = jnp.zeros((B, 2 * H), jnp.float32)

            # Fully unrolled time loop: the only per-step MXU work is the
            # (B, 2H) @ (2H, 8H) recurrent matmul.
            for s in range(T):
                r = T - 1 - s
                x_part = P[s * B:(s + 1) * B, :] + Q[r * B:(r + 1) * B, :]
                if s == 0:
                    gates = x_part                      # h == 0 at step 0
                else:
                    gates = jnp.dot(h, whh,
                                    preferred_element_type=jnp.float32) + x_part

                sg = jax.nn.sigmoid(gates[:, :6 * H])   # i, f, o (both dirs)
                gg = jnp.tanh(gates[:, 6 * H:])         # g (both dirs)
                ig = sg[:, 0 * H:2 * H]
                fg = sg[:, 2 * H:4 * H]
                og = sg[:, 4 * H:6 * H]

                c = fg * c + ig * gg                    # [c_f | c_b]
                h = og * jnp.tanh(c)                    # [h_f(s) | h_b(T-1-s)]

                if s == 0:
                    h_first = h                         # holds h_b(T-1)
                if layer < n_layers - 1:
                    # Off-critical-path stage for next layer's hoisted matmul.
                    h_scr[s * B:(s + 1) * B, :] = h

            if layer < n_layers - 1:
                # Inter-layer dropout = identity (inference).
                U = h_scr[...]

        # Final Linear(2H -> 1) on lstm_out[:, -1, :] == [h_f(T-1) | h_b(T-1)]
        # as a VPU multiply + lane reduction (no N=1 MXU dot).
        wlin = wlin_ref[...]                            # (1, 2H)
        hf_last = h[:, :H]                              # h_f(T-1)
        hb_last = h_first[:, H:]                        # h_b(T-1)
        out = (jnp.sum(hf_last * wlin[:, :H], axis=-1, keepdims=True)
               + jnp.sum(hb_last * wlin[:, H:], axis=-1, keepdims=True)
               + blin_ref[...])
        out_ref[...] = out

    return kernel


# ----------------------------------------------------------------------------
# Host-side (numpy) weight packing — done ONCE, not per call.
# ----------------------------------------------------------------------------
def _gate_scatter(w_T, direction, H):
    """w_T: (rows, 4H) in torch gate order [i f g o].  Returns (rows, 8H) with
    this direction's gates placed into the interleaved column layout
    [i_f i_b f_f f_b o_f o_b g_f g_b]; other direction's columns are zero."""
    rows = w_T.shape[0]
    out = np.zeros((rows, 8 * H), np.float32)
    src = {"i": 0, "f": 1, "g": 2, "o": 3}          # torch order
    dst = {"i": 0, "f": 2, "o": 4, "g": 6}          # interleaved order
    for gate in ("i", "f", "g", "o"):
        sb, db = src[gate], dst[gate] + direction
        out[:, db * H:(db + 1) * H] = w_T[:, sb * H:(sb + 1) * H]
    return out


def pack_params(params, n_layers, hidden_dim):
    H = hidden_dim
    packed = []
    for layer in range(n_layers):
        w_ih_f = np.asarray(params[f"weight_ih_l{layer}"], np.float32)
        w_hh_f = np.asarray(params[f"weight_hh_l{layer}"], np.float32)
        w_ih_b = np.asarray(params[f"weight_ih_l{layer}_reverse"], np.float32)
        w_hh_b = np.asarray(params[f"weight_hh_l{layer}_reverse"], np.float32)
        b_f = (np.asarray(params[f"bias_ih_l{layer}"], np.float32)
               + np.asarray(params[f"bias_hh_l{layer}"], np.float32))
        b_b = (np.asarray(params[f"bias_ih_l{layer}_reverse"], np.float32)
               + np.asarray(params[f"bias_hh_l{layer}_reverse"], np.float32))

        Wf = _gate_scatter(w_ih_f.T, 0, H)          # (Din, 8H), fwd cols
        Wb = _gate_scatter(w_ih_b.T, 1, H)          # (Din, 8H), rev cols
        if layer == 0:
            wa, wb = Wf, Wb
        else:
            # Layer input at step s is U[s] = [h_f(s) | h_b(T-1-s)]; fold the
            # fwd/rev feature permutation into the weights (row swap).
            wa = np.vstack([Wf[:H], Wb[H:]])
            wb = np.vstack([Wb[:H], Wf[H:]])

        whh = np.vstack([_gate_scatter(w_hh_f.T, 0, H),
                         _gate_scatter(w_hh_b.T, 1, H)])      # (2H, 8H)
        bias = (_gate_scatter(b_f.reshape(1, 4 * H), 0, H)
                + _gate_scatter(b_b.reshape(1, 4 * H), 1, H))  # (1, 8H)
        packed += [wa, wb, whh, bias]

    packed.append(np.asarray(params["linear_weight"], np.float32).reshape(1, 2 * H))
    packed.append(np.asarray(params["linear_bias"], np.float32).reshape(1, 1))
    return tuple(jnp.asarray(p) for p in packed)


# ----------------------------------------------------------------------------
# Jitted wrapper
# ----------------------------------------------------------------------------
@functools.partial(jax.jit, static_argnames=("n_layers", "hidden_dim"))
def lstm_forward(text, packed, *, n_layers, hidden_dim):
    """Equivalent of LSTM.forward(text): text (B, T, E) batch_first -> (B, 1)."""
    x = jnp.asarray(text, jnp.float32)
    B, T, E = x.shape
    H = hidden_dim
    xs = jnp.transpose(x, (1, 0, 2)).reshape(T * B, E)   # time-major rows

    scratch = []
    if n_layers > 1:
        scratch.append(pltpu.VMEM((T * B, 2 * H), jnp.float32))

    kernel = _make_bilstm_head_kernel(n_layers, T, B, H)
    return pl.pallas_call(
        kernel,
        out_shape=jax.ShapeDtypeStruct((B, 1), jnp.float32),
        scratch_shapes=scratch,
    )(xs, *packed)


# ----------------------------------------------------------------------------
# Pure-JAX reference (correctness check)
# ----------------------------------------------------------------------------
def _ref_direction(x, w_ih, w_hh, b_ih, b_hh, reverse):
    T, B, _ = x.shape
    H = w_hh.shape[1]
    seq = x[::-1] if reverse else x

    def step(carry, xt):
        h, c = carry
        gates = xt @ w_ih.T + h @ w_hh.T + b_ih + b_hh
        i = jax.nn.sigmoid(gates[:, :H])
        f = jax.nn.sigmoid(gates[:, H:2 * H])
        g = jnp.tanh(gates[:, 2 * H:3 * H])
        o = jax.nn.sigmoid(gates[:, 3 * H:])
        c = f * c + i * g
        h = o * jnp.tanh(c)
        return (h, c), h

    init = (jnp.zeros((B, H), jnp.float32), jnp.zeros((B, H), jnp.float32))
    _, ys = jax.lax.scan(step, init, seq)
    return ys[::-1] if reverse else ys


def ref_forward(text, params, n_layers, hidden_dim):
    x = jnp.transpose(jnp.asarray(text, jnp.float32), (1, 0, 2))
    for layer in range(n_layers):
        y_f = _ref_direction(x, params[f"weight_ih_l{layer}"], params[f"weight_hh_l{layer}"],
                             params[f"bias_ih_l{layer}"], params[f"bias_hh_l{layer}"], False)
        y_b = _ref_direction(x, params[f"weight_ih_l{layer}_reverse"], params[f"weight_hh_l{layer}_reverse"],
                             params[f"bias_ih_l{layer}_reverse"], params[f"bias_hh_l{layer}_reverse"], True)
        x = jnp.concatenate([y_f, y_b], axis=-1)
    return x[-1] @ params["linear_weight"].T + params["linear_bias"]


# ----------------------------------------------------------------------------
# Deterministic parameter construction (PyTorch shapes)
# ----------------------------------------------------------------------------
def init_params(key, embedding_dim, hidden_dim, n_layers):
    params = {}
    bound = 1.0 / np.sqrt(hidden_dim)
    for layer in range(n_layers):
        in_dim = embedding_dim if layer == 0 else 2 * hidden_dim
        for suffix in ("", "_reverse"):
            for name, shape in [
                (f"weight_ih_l{layer}{suffix}", (4 * hidden_dim, in_dim)),
                (f"weight_hh_l{layer}{suffix}", (4 * hidden_dim, hidden_dim)),
                (f"bias_ih_l{layer}{suffix}", (4 * hidden_dim,)),
                (f"bias_hh_l{layer}{suffix}", (4 * hidden_dim,)),
            ]:
                key, sub = jax.random.split(key)
                params[name] = jax.random.uniform(
                    sub, shape, jnp.float32, minval=-bound, maxval=bound)
    lin_bound = 1.0 / np.sqrt(2 * hidden_dim)
    key, sub = jax.random.split(key)
    params["linear_weight"] = jax.random.uniform(
        sub, (1, 2 * hidden_dim), jnp.float32, minval=-lin_bound, maxval=lin_bound)
    key, sub = jax.random.split(key)
    params["linear_bias"] = jax.random.uniform(
        sub, (1,), jnp.float32, minval=-lin_bound, maxval=lin_bound)
    return params


# ----------------------------------------------------------------------------
if __name__ == "__main__":
    # B is a multiple of 8 to fill vreg sublanes (perf review).
    B, T, E, H, N_LAYERS = 8, 8, 16, 32, 2

    key = jax.random.PRNGKey(0)
    key, pkey, xkey = jax.random.split(key, 3)
    params = init_params(pkey, embedding_dim=E, hidden_dim=H, n_layers=N_LAYERS)
    text = jax.random.normal(xkey, (B, T, E), jnp.float32)   # (B, T, E) batch_first

    packed = pack_params(params, N_LAYERS, H)                # host-side, once

    out = jax.block_until_ready(
        lstm_forward(text, packed, n_layers=N_LAYERS, hidden_dim=H))
    ref = jax.block_until_ready(ref_forward(text, params, N_LAYERS, H))

    assert out.shape == (B, 1), out.shape
    np.testing.assert_allclose(np.asarray(out), np.asarray(ref), rtol=2e-5, atol=2e-5)

    print("KERNEL_OK")
</pallas_src>

<mosaic_0001>
module attributes {stable_mosaic.version = 11 : i64} {
  func.func @kernel(%arg0: memref<64x16xf32, #tpu.memory_space<vmem>>, %arg1: memref<16x256xf32, #tpu.memory_space<vmem>>, %arg2: memref<16x256xf32, #tpu.memory_space<vmem>>, %arg3: memref<64x256xf32, #tpu.memory_space<vmem>>, %arg4: memref<1x256xf32, #tpu.memory_space<vmem>>, %arg5: memref<64x256xf32, #tpu.memory_space<vmem>>, %arg6: memref<64x256xf32, #tpu.memory_space<vmem>>, %arg7: memref<64x256xf32, #tpu.memory_space<vmem>>, %arg8: memref<1x256xf32, #tpu.memory_space<vmem>>, %arg9: memref<1x64xf32, #tpu.memory_space<vmem>>, %arg10: memref<1x1xf32, #tpu.memory_space<vmem>>, %arg11: memref<8x1xf32, #tpu.memory_space<vmem>>, %arg12: memref<64x64xf32, #tpu.memory_space<vmem>>) attributes {dimension_semantics = [], scalar_prefetch = 0 : i64, scratch_operands = 1 : i64, tpu.core_type = #tpu.core_type<tc>} {
    %c0 = arith.constant 0 : index
    %c0_0 = arith.constant 0 : index
    %0 = vector.load %arg0[%c0, %c0_0] : memref<64x16xf32, #tpu.memory_space<vmem>>, vector<64x16xf32>
    %c0_1 = arith.constant 0 : index
    %c0_2 = arith.constant 0 : index
    %1 = vector.load %arg1[%c0_1, %c0_2] : memref<16x256xf32, #tpu.memory_space<vmem>>, vector<16x256xf32>
    %c0_3 = arith.constant 0 : index
    %c0_4 = arith.constant 0 : index
    %2 = vector.load %arg2[%c0_3, %c0_4] : memref<16x256xf32, #tpu.memory_space<vmem>>, vector<16x256xf32>
    %c0_5 = arith.constant 0 : index
    %c0_6 = arith.constant 0 : index
    %3 = vector.load %arg3[%c0_5, %c0_6] : memref<64x256xf32, #tpu.memory_space<vmem>>, vector<64x256xf32>
    %c0_7 = arith.constant 0 : index
    %c0_8 = arith.constant 0 : index
    %4 = vector.load %arg4[%c0_7, %c0_8] : memref<1x256xf32, #tpu.memory_space<vmem>>, vector<1x256xf32>
    %cst = arith.constant dense<0.000000e+00> : vector<64x256xf32>
    %5 = tpu.matmul %0, %1, %cst {dimension_numbers = #tpu.dot_dimension_numbers<[1], [0], [0], [1], [0, 0, 1, 1], [], []>} : vector<64x16xf32>, vector<16x256xf32>, vector<64x256xf32> -> vector<64x256xf32>
    %6 = vector.broadcast %4 : vector<1x256xf32> to vector<64x256xf32>
    %7 = arith.addf %5, %6 : vector<64x256xf32>
    %cst_9 = arith.constant dense<0.000000e+00> : vector<64x256xf32>
    %8 = tpu.matmul %0, %2, %cst_9 {dimension_numbers = #tpu.dot_dimension_numbers<[1], [0], [0], [1], [0, 0, 1, 1], [], []>} : vector<64x16xf32>, vector<16x256xf32>, vector<64x256xf32> -> vector<64x256xf32>
    %cst_10 = arith.constant 0.000000e+00 : f32
    %9 = vector.broadcast %cst_10 : f32 to vector<8x64xf32>
    %10 = vector.extract_strided_slice %7 {offsets = [0, 0], sizes = [8, 256], strides = [1, 1]} : vector<64x256xf32> to vector<8x256xf32>
    %11 = vector.extract_strided_slice %8 {offsets = [56, 0], sizes = [8, 256], strides = [1, 1]} : vector<64x256xf32> to vector<8x256xf32>
    %12 = arith.addf %10, %11 : vector<8x256xf32>
    %13 = vector.extract_strided_slice %12 {offsets = [0, 0], sizes = [8, 192], strides = [1, 1]} : vector<8x256xf32> to vector<8x192xf32>
    %14 = arith.negf %13 : vector<8x192xf32>
    %15 = math.exp %14 : vector<8x192xf32>
    %cst_11 = arith.constant 1.000000e+00 : f32
    %16 = vector.broadcast %cst_11 : f32 to vector<8x192xf32>
    %17 = arith.addf %16, %15 : vector<8x192xf32>
    %18 = arith.divf %16, %17 : vector<8x192xf32>
    %19 = vector.extract_strided_slice %12 {offsets = [0, 192], sizes = [8, 64], strides = [1, 1]} : vector<8x256xf32> to vector<8x64xf32>
    %20 = math.tanh %19 : vector<8x64xf32>
    %21 = vector.extract_strided_slice %18 {offsets = [0, 0], sizes = [8, 64], strides = [1, 1]} : vector<8x192xf32> to vector<8x64xf32>
    %22 = vector.extract_strided_slice %18 {offsets = [0, 64], sizes = [8, 64], strides = [1, 1]} : vector<8x192xf32> to vector<8x64xf32>
    %23 = vector.extract_strided_slice %18 {offsets = [0, 128], sizes = [8, 64], strides = [1, 1]} : vector<8x192xf32> to vector<8x64xf32>
    %24 = arith.mulf %22, %9 : vector<8x64xf32>
    %25 = arith.mulf %21, %20 : vector<8x64xf32>
    %26 = arith.addf %24, %25 : vector<8x64xf32>
    %27 = math.tanh %26 : vector<8x64xf32>
    %28 = arith.mulf %23, %27 : vector<8x64xf32>
    %c0_12 = arith.constant 0 : index
    %c0_13 = arith.constant 0 : index
    %29 = vector.load %arg12[%c0_12, %c0_13] : memref<64x64xf32, #tpu.memory_space<vmem>>, vector<8x64xf32>
    tpu.vector_store %arg12[%c0_12, %c0_13], %28 {strides = array<i32>} : memref<64x64xf32, #tpu.memory_space<vmem>>, vector<8x64xf32>,
    %30 = vector.extract_strided_slice %7 {offsets = [8, 0], sizes = [8, 256], strides = [1, 1]} : vector<64x256xf32> to vector<8x256xf32>
    %31 = vector.extract_strided_slice %8 {offsets = [48, 0], sizes = [8, 256], strides = [1, 1]} : vector<64x256xf32> to vector<8x256xf32>
    %32 = arith.addf %30, %31 : vector<8x256xf32>
    %cst_14 = arith.constant dense<0.000000e+00> : vector<8x256xf32>
    %33 = tpu.matmul %28, %3, %cst_14 {dimension_numbers = #tpu.dot_dimension_numbers<[1], [0], [0], [1], [0, 0, 1, 1], [], []>} : vector<8x64xf32>, vector<64x256xf32>, vector<8x256xf32> -> vector<8x256xf32>
    %34 = arith.addf %33, %32 : vector<8x256xf32>
    %35 = vector.extract_strided_slice %34 {offsets = [0, 0], sizes = [8, 192], strides = [1, 1]} : vector<8x256xf32> to vector<8x192xf32>
    %36 = arith.negf %35 : vector<8x192xf32>
    %37 = math.exp %36 : vector<8x192xf32>
    %cst_15 = arith.constant 1.000000e+00 : f32
    %38 = vector.broadcast %cst_15 : f32 to vector<8x192xf32>
    %39 = arith.addf %38, %37 : vector<8x192xf32>
    %40 = arith.divf %38, %39 : vector<8x192xf32>
    %41 = vector.extract_strided_slice %34 {offsets = [0, 192], sizes = [8, 64], strides = [1, 1]} : vector<8x256xf32> to vector<8x64xf32>
    %42 = math.tanh %41 : vector<8x64xf32>
    %43 = vector.extract_strided_slice %40 {offsets = [0, 0], sizes = [8, 64], strides = [1, 1]} : vector<8x192xf32> to vector<8x64xf32>
    %44 = vector.extract_strided_slice %40 {offsets = [0, 64], sizes = [8, 64], strides = [1, 1]} : vector<8x192xf32> to vector<8x64xf32>
    %45 = vector.extract_strided_slice %40 {offsets = [0, 128], sizes = [8, 64], strides = [1, 1]} : vector<8x192xf32> to vector<8x64xf32>
    %46 = arith.mulf %44, %26 : vector<8x64xf32>
    %47 = arith.mulf %43, %42 : vector<8x64xf32>
    %48 = arith.addf %46, %47 : vector<8x64xf32>
    %49 = math.tanh %48 : vector<8x64xf32>
    %50 = arith.mulf %45, %49 : vector<8x64xf32>
    %c8 = arith.constant 8 : index
    %c0_16 = arith.constant 0 : index
    %51 = vector.load %arg12[%c8, %c0_16] : memref<64x64xf32, #tpu.memory_space<vmem>>, vector<8x64xf32>
    tpu.vector_store %arg12[%c8, %c0_16], %50 {strides = array<i32>} : memref<64x64xf32, #tpu.memory_space<vmem>>, vector<8x64xf32>,
    %52 = vector.extract_strided_slice %7 {offsets = [16, 0], sizes = [8, 256], strides = [1, 1]} : vector<64x256xf32> to vector<8x256xf32>
    %53 = vector.extract_strided_slice %8 {offsets = [40, 0], sizes = [8, 256], strides = [1, 1]} : vector<64x256xf32> to vector<8x256xf32>
    %54 = arith.addf %52, %53 : vector<8x256xf32>
    %cst_17 = arith.constant dense<0.000000e+00> : vector<8x256xf32>
    %55 = tpu.matmul %50, %3, %cst_17 {dimension_numbers = #tpu.dot_dimension_numbers<[1], [0], [0], [1], [0, 0, 1, 1], [], []>} : vector<8x64xf32>, vector<64x256xf32>, vector<8x256xf32> -> vector<8x256xf32>
    %56 = arith.addf %55, %54 : vector<8x256xf32>
    %57 = vector.extract_strided_slice %56 {offsets = [0, 0], sizes = [8, 192], strides = [1, 1]} : vector<8x256xf32> to vector<8x192xf32>
    %58 = arith.negf %57 : vector<8x192xf32>
    %59 = math.exp %58 : vector<8x192xf32>
    %cst_18 = arith.constant 1.000000e+00 : f32
    %60 = vector.broadcast %cst_18 : f32 to vector<8x192xf32>
    %61 = arith.addf %60, %59 : vector<8x192xf32>
    %62 = arith.divf %60, %61 : vector<8x192xf32>
    %63 = vector.extract_strided_slice %56 {offsets = [0, 192], sizes = [8, 64], strides = [1, 1]} : vector<8x256xf32> to vector<8x64xf32>
    %64 = math.tanh %63 : vector<8x64xf32>
    %65 = vector.extract_strided_slice %62 {offsets = [0, 0], sizes = [8, 64], strides = [1, 1]} : vector<8x192xf32> to vector<8x64xf32>
    %66 = vector.extract_strided_slice %62 {offsets = [0, 64], sizes = [8, 64], strides = [1, 1]} : vector<8x192xf32> to vector<8x64xf32>
    %67 = vector.extract_strided_slice %62 {offsets = [0, 128], sizes = [8, 64], strides = [1, 1]} : vector<8x192xf32> to vector<8x64xf32>
    %68 = arith.mulf %66, %48 : vector<8x64xf32>
    %69 = arith.mulf %65, %64 : vector<8x64xf32>
    %70 = arith.addf %68, %69 : vector<8x64xf32>
    %71 = math.tanh %70 : vector<8x64xf32>
    %72 = arith.mulf %67, %71 : vector<8x64xf32>
    %c16 = arith.constant 16 : index
    %c0_19 = arith.constant 0 : index
    %73 = vector.load %arg12[%c16, %c0_19] : memref<64x64xf32, #tpu.memory_space<vmem>>, vector<8x64xf32>
    tpu.vector_store %arg12[%c16, %c0_19], %72 {strides = array<i32>} : memref<64x64xf32, #tpu.memory_space<vmem>>, vector<8x64xf32>,
    %74 = vector.extract_strided_slice %7 {offsets = [24, 0], sizes = [8, 256], strides = [1, 1]} : vector<64x256xf32> to vector<8x256xf32>
    %75 = vector.extract_strided_slice %8 {offsets = [32, 0], sizes = [8, 256], strides = [1, 1]} : vector<64x256xf32> to vector<8x256xf32>
    %76 = arith.addf %74, %75 : vector<8x256xf32>
    %cst_20 = arith.constant dense<0.000000e+00> : vector<8x256xf32>
    %77 = tpu.matmul %72, %3, %cst_20 {dimension_numbers = #tpu.dot_dimension_numbers<[1], [0], [0], [1], [0, 0, 1, 1], [], []>} : vector<8x64xf32>, vector<64x256xf32>, vector<8x256xf32> -> vector<8x256xf32>
    %78 = arith.addf %77, %76 : vector<8x256xf32>
    %79 = vector.extract_strided_slice %78 {offsets = [0, 0], sizes = [8, 192], strides = [1, 1]} : vector<8x256xf32> to vector<8x192xf32>
    %80 = arith.negf %79 : vector<8x192xf32>
    %81 = math.exp %80 : vector<8x192xf32>
    %cst_21 = arith.constant 1.000000e+00 : f32
    %82 = vector.broadcast %cst_21 : f32 to vector<8x192xf32>
    %83 = arith.addf %82, %81 : vector<8x192xf32>
    %84 = arith.divf %82, %83 : vector<8x192xf32>
    %85 = vector.extract_strided_slice %78 {offsets = [0, 192], sizes = [8, 64], strides = [1, 1]} : vector<8x256xf32> to vector<8x64xf32>
    %86 = math.tanh %85 : vector<8x64xf32>
    %87 = vector.extract_strided_slice %84 {offsets = [0, 0], sizes = [8, 64], strides = [1, 1]} : vector<8x192xf32> to vector<8x64xf32>
    %88 = vector.extract_strided_slice %84 {offsets = [0, 64], sizes = [8, 64], strides = [1, 1]} : vector<8x192xf32> to vector<8x64xf32>
    %89 = vector.extract_strided_slice %84 {offsets = [0, 128], sizes = [8, 64], strides = [1, 1]} : vector<8x192xf32> to vector<8x64xf32>
    %90 = arith.mulf %88, %70 : vector<8x64xf32>
    %91 = arith.mulf %87, %86 : vector<8x64xf32>
    %92 = arith.addf %90, %91 : vector<8x64xf32>
    %93 = math.tanh %92 : vector<8x64xf32>
    %94 = arith.mulf %89, %93 : vector<8x64xf32>
    %c24 = arith.constant 24 : index
    %c0_22 = arith.constant 0 : index
    %95 = vector.load %arg12[%c24, %c0_22] : memref<64x64xf32, #tpu.memory_space<vmem>>, vector<8x64xf32>
    tpu.vector_store %arg12[%c24, %c0_22], %94 {strides = array<i32>} : memref<64x64xf32, #tpu.memory_space<vmem>>, vector<8x64xf32>,
    %96 = vector.extract_strided_slice %7 {offsets = [32, 0], sizes = [8, 256], strides = [1, 1]} : vector<64x256xf32> to vector<8x256xf32>
    %97 = vector.extract_strided_slice %8 {offsets = [24, 0], sizes = [8, 256], strides = [1, 1]} : vector<64x256xf32> to vector<8x256xf32>
    %98 = arith.addf %96, %97 : vector<8x256xf32>
    %cst_23 = arith.constant dense<0.000000e+00> : vector<8x256xf32>
    %99 = tpu.matmul %94, %3, %cst_23 {dimension_numbers = #tpu.dot_dimension_numbers<[1], [0], [0], [1], [0, 0, 1, 1], [], []>} : vector<8x64xf32>, vector<64x256xf32>, vector<8x256xf32> -> vector<8x256xf32>
    %100 = arith.addf %99, %98 : vector<8x256xf32>
    %101 = vector.extract_strided_slice %100 {offsets = [0, 0], sizes = [8, 192], strides = [1, 1]} : vector<8x256xf32> to vector<8x192xf32>
    %102 = arith.negf %101 : vector<8x192xf32>
    %103 = math.exp %102 : vector<8x192xf32>
    %cst_24 = arith.constant 1.000000e+00 : f32
    %104 = vector.broadcast %cst_24 : f32 to vector<8x192xf32>
    %105 = arith.addf %104, %103 : vector<8x192xf32>
    %106 = arith.divf %104, %105 : vector<8x192xf32>
    %107 = vector.extract_strided_slice %100 {offsets = [0, 192], sizes = [8, 64], strides = [1, 1]} : vector<8x256xf32> to vector<8x64xf32>
    %108 = math.tanh %107 : vector<8x64xf32>
    %109 = vector.extract_strided_slice %106 {offsets = [0, 0], sizes = [8, 64], strides = [1, 1]} : vector<8x192xf32> to vector<8x64xf32>
    %110 = vector.extract_strided_slice %106 {offsets = [0, 64], sizes = [8, 64], strides = [1, 1]} : vector<8x192xf32> to vector<8x64xf32>
    %111 = vector.extract_strided_slice %106 {offsets = [0, 128], sizes = [8, 64], strides = [1, 1]} : vector<8x192xf32> to vector<8x64xf32>
    %112 = arith.mulf %110, %92 : vector<8x64xf32>
    %113 = arith.mulf %109, %108 : vector<8x64xf32>
    %114 = arith.addf %112, %113 : vector<8x64xf32>
    %115 = math.tanh %114 : vector<8x64xf32>
    %116 = arith.mulf %111, %115 : vector<8x64xf32>
    %c32 = arith.constant 32 : index
    %c0_25 = arith.constant 0 : index
    %117 = vector.load %arg12[%c32, %c0_25] : memref<64x64xf32, #tpu.memory_space<vmem>>, vector<8x64xf32>
    tpu.vector_store %arg12[%c32, %c0_25], %116 {strides = array<i32>} : memref<64x64xf32, #tpu.memory_space<vmem>>, vector<8x64xf32>,
    %118 = vector.extract_strided_slice %7 {offsets = [40, 0], sizes = [8, 256], strides = [1, 1]} : vector<64x256xf32> to vector<8x256xf32>
    %119 = vector.extract_strided_slice %8 {offsets = [16, 0], sizes = [8, 256], strides = [1, 1]} : vector<64x256xf32> to vector<8x256xf32>
    %120 = arith.addf %118, %119 : vector<8x256xf32>
    %cst_26 = arith.constant dense<0.000000e+00> : vector<8x256xf32>
    %121 = tpu.matmul %116, %3, %cst_26 {dimension_numbers = #tpu.dot_dimension_numbers<[1], [0], [0], [1], [0, 0, 1, 1], [], []>} : vector<8x64xf32>, vector<64x256xf32>, vector<8x256xf32> -> vector<8x256xf32>
    %122 = arith.addf %121, %120 : vector<8x256xf32>
    %123 = vector.extract_strided_slice %122 {offsets = [0, 0], sizes = [8, 192], strides = [1, 1]} : vector<8x256xf32> to vector<8x192xf32>
    %124 = arith.negf %123 : vector<8x192xf32>
    %125 = math.exp %124 : vector<8x192xf32>
    %cst_27 = arith.constant 1.000000e+00 : f32
    %126 = vector.broadcast %cst_27 : f32 to vector<8x192xf32>
    %127 = arith.addf %126, %125 : vector<8x192xf32>
    %128 = arith.divf %126, %127 : vector<8x192xf32>
    %129 = vector.extract_strided_slice %122 {offsets = [0, 192], sizes = [8, 64], strides = [1, 1]} : vector<8x256xf32> to vector<8x64xf32>
    %130 = math.tanh %129 : vector<8x64xf32>
    %131 = vector.extract_strided_slice %128 {offsets = [0, 0], sizes = [8, 64], strides = [1, 1]} : vector<8x192xf32> to vector<8x64xf32>
    %132 = vector.extract_strided_slice %128 {offsets = [0, 64], sizes = [8, 64], strides = [1, 1]} : vector<8x192xf32> to vector<8x64xf32>
    %133 = vector.extract_strided_slice %128 {offsets = [0, 128], sizes = [8, 64], strides = [1, 1]} : vector<8x192xf32> to vector<8x64xf32>
    %134 = arith.mulf %132, %114 : vector<8x64xf32>
    %135 = arith.mulf %131, %130 : vector<8x64xf32>
    %136 = arith.addf %134, %135 : vector<8x64xf32>
    %137 = math.tanh %136 : vector<8x64xf32>
    %138 = arith.mulf %133, %137 : vector<8x64xf32>
    %c40 = arith.constant 40 : index
    %c0_28 = arith.constant 0 : index
    %139 = vector.load %arg12[%c40, %c0_28] : memref<64x64xf32, #tpu.memory_space<vmem>>, vector<8x64xf32>
    tpu.vector_store %arg12[%c40, %c0_28], %138 {strides = array<i32>} : memref<64x64xf32, #tpu.memory_space<vmem>>, vector<8x64xf32>,
    %140 = vector.extract_strided_slice %7 {offsets = [48, 0], sizes = [8, 256], strides = [1, 1]} : vector<64x256xf32> to vector<8x256xf32>
    %141 = vector.extract_strided_slice %8 {offsets = [8, 0], sizes = [8, 256], strides = [1, 1]} : vector<64x256xf32> to vector<8x256xf32>
    %142 = arith.addf %140, %141 : vector<8x256xf32>
    %cst_29 = arith.constant dense<0.000000e+00> : vector<8x256xf32>
    %143 = tpu.matmul %138, %3, %cst_29 {dimension_numbers = #tpu.dot_dimension_numbers<[1], [0], [0], [1], [0, 0, 1, 1], [], []>} : vector<8x64xf32>, vector<64x256xf32>, vector<8x256xf32> -> vector<8x256xf32>
    %144 = arith.addf %143, %142 : vector<8x256xf32>
    %145 = vector.extract_strided_slice %144 {offsets = [0, 0], sizes = [8, 192], strides = [1, 1]} : vector<8x256xf32> to vector<8x192xf32>
    %146 = arith.negf %145 : vector<8x192xf32>
    %147 = math.exp %146 : vector<8x192xf32>
    %cst_30 = arith.constant 1.000000e+00 : f32
    %148 = vector.broadcast %cst_30 : f32 to vector<8x192xf32>
    %149 = arith.addf %148, %147 : vector<8x192xf32>
    %150 = arith.divf %148, %149 : vector<8x192xf32>
    %151 = vector.extract_strided_slice %144 {offsets = [0, 192], sizes = [8, 64], strides = [1, 1]} : vector<8x256xf32> to vector<8x64xf32>
    %152 = math.tanh %151 : vector<8x64xf32>
    %153 = vector.extract_strided_slice %150 {offsets = [0, 0], sizes = [8, 64], strides = [1, 1]} : vector<8x192xf32> to vector<8x64xf32>
    %154 = vector.extract_strided_slice %150 {offsets = [0, 64], sizes = [8, 64], strides = [1, 1]} : vector<8x192xf32> to vector<8x64xf32>
    %155 = vector.extract_strided_slice %150 {offsets = [0, 128], sizes = [8, 64], strides = [1, 1]} : vector<8x192xf32> to vector<8x64xf32>
    %156 = arith.mulf %154, %136 : vector<8x64xf32>
    %157 = arith.mulf %153, %152 : vector<8x64xf32>
    %158 = arith.addf %156, %157 : vector<8x64xf32>
    %159 = math.tanh %158 : vector<8x64xf32>
    %160 = arith.mulf %155, %159 : vector<8x64xf32>
    %c48 = arith.constant 48 : index
    %c0_31 = arith.constant 0 : index
    %161 = vector.load %arg12[%c48, %c0_31] : memref<64x64xf32, #tpu.memory_space<vmem>>, vector<8x64xf32>
    tpu.vector_store %arg12[%c48, %c0_31], %160 {strides = array<i32>} : memref<64x64xf32, #tpu.memory_space<vmem>>, vector<8x64xf32>,
    %162 = vector.extract_strided_slice %7 {offsets = [56, 0], sizes = [8, 256], strides = [1, 1]} : vector<64x256xf32> to vector<8x256xf32>
    %163 = vector.extract_strided_slice %8 {offsets = [0, 0], sizes = [8, 256], strides = [1, 1]} : vector<64x256xf32> to vector<8x256xf32>
    %164 = arith.addf %162, %163 : vector<8x256xf32>
    %cst_32 = arith.constant dense<0.000000e+00> : vector<8x256xf32>
    %165 = tpu.matmul %160, %3, %cst_32 {dimension_numbers = #tpu.dot_dimension_numbers<[1], [0], [0], [1], [0, 0, 1, 1], [], []>} : vector<8x64xf32>, vector<64x256xf32>, vector<8x256xf32> -> vector<8x256xf32>
    %166 = arith.addf %165, %164 : vector<8x256xf32>
    %167 = vector.extract_strided_slice %166 {offsets = [0, 0], sizes = [8, 192], strides = [1, 1]} : vector<8x256xf32> to vector<8x192xf32>
    %168 = arith.negf %167 : vector<8x192xf32>
    %169 = math.exp %168 : vector<8x192xf32>
    %cst_33 = arith.constant 1.000000e+00 : f32
    %170 = vector.broadcast %cst_33 : f32 to vector<8x192xf32>
    %171 = arith.addf %170, %169 : vector<8x192xf32>
    %172 = arith.divf %170, %171 : vector<8x192xf32>
    %173 = vector.extract_strided_slice %166 {offsets = [0, 192], sizes = [8, 64], strides = [1, 1]} : vector<8x256xf32> to vector<8x64xf32>
    %174 = math.tanh %173 : vector<8x64xf32>
    %175 = vector.extract_strided_slice %172 {offsets = [0, 0], sizes = [8, 64], strides = [1, 1]} : vector<8x192xf32> to vector<8x64xf32>
    %176 = vector.extract_strided_slice %172 {offsets = [0, 64], sizes = [8, 64], strides = [1, 1]} : vector<8x192xf32> to vector<8x64xf32>
    %177 = vector.extract_strided_slice %172 {offsets = [0, 128], sizes = [8, 64], strides = [1, 1]} : vector<8x192xf32> to vector<8x64xf32>
    %178 = arith.mulf %176, %158 : vector<8x64xf32>
    %179 = arith.mulf %175, %174 : vector<8x64xf32>
    %180 = arith.addf %178, %179 : vector<8x64xf32>
    %181 = math.tanh %180 : vector<8x64xf32>
    %182 = arith.mulf %177, %181 : vector<8x64xf32>
    %c56 = arith.constant 56 : index
    %c0_34 = arith.constant 0 : index
    %183 = vector.load %arg12[%c56, %c0_34] : memref<64x64xf32, #tpu.memory_space<vmem>>, vector<8x64xf32>
    tpu.vector_store %arg12[%c56, %c0_34], %182 {strides = array<i32>} : memref<64x64xf32, #tpu.memory_space<vmem>>, vector<8x64xf32>,
    %c0_35 = arith.constant 0 : index
    %c0_36 = arith.constant 0 : index
    %184 = vector.load %arg12[%c0_35, %c0_36] : memref<64x64xf32, #tpu.memory_space<vmem>>, vector<64x64xf32>
    %c0_37 = arith.constant 0 : index
    %c0_38 = arith.constant 0 : index
    %185 = vector.load %arg5[%c0_37, %c0_38] : memref<64x256xf32, #tpu.memory_space<vmem>>, vector<64x256xf32>
    %c0_39 = arith.constant 0 : index
    %c0_40 = arith.constant 0 : index
    %186 = vector.load %arg6[%c0_39, %c0_40] : memref<64x256xf32, #tpu.memory_space<vmem>>, vector<64x256xf32>
    %c0_41 = arith.constant 0 : index
    %c0_42 = arith.constant 0 : index
    %187 = vector.load %arg7[%c0_41, %c0_42] : memref<64x256xf32, #tpu.memory_space<vmem>>, vector<64x256xf32>
    %c0_43 = arith.constant 0 : index
    %c0_44 = arith.constant 0 : index
    %188 = vector.load %arg8[%c0_43, %c0_44] : memref<1x256xf32, #tpu.memory_space<vmem>>, vector<1x256xf32>
    %cst_45 = arith.constant dense<0.000000e+00> : vector<64x256xf32>
    %189 = tpu.matmul %184, %185, %cst_45 {dimension_numbers = #tpu.dot_dimension_numbers<[1], [0], [0], [1], [0, 0, 1, 1], [], []>} : vector<64x64xf32>, vector<64x256xf32>, vector<64x256xf32> -> vector<64x256xf32>
    %190 = vector.broadcast %188 : vector<1x256xf32> to vector<64x256xf32>
    %191 = arith.addf %189, %190 : vector<64x256xf32>
    %cst_46 = arith.constant dense<0.000000e+00> : vector<64x256xf32>
    %192 = tpu.matmul %184, %186, %cst_46 {dimension_numbers = #tpu.dot_dimension_numbers<[1], [0], [0], [1], [0, 0, 1, 1], [], []>} : vector<64x64xf32>, vector<64x256xf32>, vector<64x256xf32> -> vector<64x256xf32>
    %cst_47 = arith.constant 0.000000e+00 : f32
    %193 = vector.broadcast %cst_47 : f32 to vector<8x64xf32>
    %194 = vector.extract_strided_slice %191 {offsets = [0, 0], sizes = [8, 256], strides = [1, 1]} : vector<64x256xf32> to vector<8x256xf32>
    %195 = vector.extract_strided_slice %192 {offsets = [56, 0], sizes = [8, 256], strides = [1, 1]} : vector<64x256xf32> to vector<8x256xf32>
    %196 = arith.addf %194, %195 : vector<8x256xf32>
    %197 = vector.extract_strided_slice %196 {offsets = [0, 0], sizes = [8, 192], strides = [1, 1]} : vector<8x256xf32> to vector<8x192xf32>
    %198 = arith.negf %197 : vector<8x192xf32>
    %199 = math.exp %198 : vector<8x192xf32>
    %cst_48 = arith.constant 1.000000e+00 : f32
    %200 = vector.broadcast %cst_48 : f32 to vector<8x192xf32>
    %201 = arith.addf %200, %199 : vector<8x192xf32>
    %202 = arith.divf %200, %201 : vector<8x192xf32>
    %203 = vector.extract_strided_slice %196 {offsets = [0, 192], sizes = [8, 64], strides = [1, 1]} : vector<8x256xf32> to vector<8x64xf32>
    %204 = math.tanh %203 : vector<8x64xf32>
    %205 = vector.extract_strided_slice %202 {offsets = [0, 0], sizes = [8, 64], strides = [1, 1]} : vector<8x192xf32> to vector<8x64xf32>
    %206 = vector.extract_strided_slice %202 {offsets = [0, 64], sizes = [8, 64], strides = [1, 1]} : vector<8x192xf32> to vector<8x64xf32>
    %207 = vector.extract_strided_slice %202 {offsets = [0, 128], sizes = [8, 64], strides = [1, 1]} : vector<8x192xf32> to vector<8x64xf32>
    %208 = arith.mulf %206, %193 : vector<8x64xf32>
    %209 = arith.mulf %205, %204 : vector<8x64xf32>
    %210 = arith.addf %208, %209 : vector<8x64xf32>
    %211 = math.tanh %210 : vector<8x64xf32>
    %212 = arith.mulf %207, %211 : vector<8x64xf32>
    %213 = vector.extract_strided_slice %191 {offsets = [8, 0], sizes = [8, 256], strides = [1, 1]} : vector<64x256xf32> to vector<8x256xf32>
    %214 = vector.extract_strided_slice %192 {offsets = [48, 0], sizes = [8, 256], strides = [1, 1]} : vector<64x256xf32> to vector<8x256xf32>
    %215 = arith.addf %213, %214 : vector<8x256xf32>
    %cst_49 = arith.constant dense<0.000000e+00> : vector<8x256xf32>
    %216 = tpu.matmul %212, %187, %cst_49 {dimension_numbers = #tpu.dot_dimension_numbers<[1], [0], [0], [1], [0, 0, 1, 1], [], []>} : vector<8x64xf32>, vector<64x256xf32>, vector<8x256xf32> -> vector<8x256xf32>
    %217 = arith.addf %216, %215 : vector<8x256xf32>
    %218 = vector.extract_strided_slice %217 {offsets = [0, 0], sizes = [8, 192], strides = [1, 1]} : vector<8x256xf32> to vector<8x192xf32>
    %219 = arith.negf %218 : vector<8x192xf32>
    %220 = math.exp %219 : vector<8x192xf32>
    %cst_50 = arith.constant 1.000000e+00 : f32
    %221 = vector.broadcast %cst_50 : f32 to vector<8x192xf32>
    %222 = arith.addf %221, %220 : vector<8x192xf32>
    %223 = arith.divf %221, %222 : vector<8x192xf32>
    %224 = vector.extract_strided_slice %217 {offsets = [0, 192], sizes = [8, 64], strides = [1, 1]} : vector<8x256xf32> to vector<8x64xf32>
    %225 = math.tanh %224 : vector<8x64xf32>
    %226 = vector.extract_strided_slice %223 {offsets = [0, 0], sizes = [8, 64], strides = [1, 1]} : vector<8x192xf32> to vector<8x64xf32>
    %227 = vector.extract_strided_slice %223 {offsets = [0, 64], sizes = [8, 64], strides = [1, 1]} : vector<8x192xf32> to vector<8x64xf32>
    %228 = vector.extract_strided_slice %223 {offsets = [0, 128], sizes = [8, 64], strides = [1, 1]} : vector<8x192xf32> to vector<8x64xf32>
    %229 = arith.mulf %227, %210 : vector<8x64xf32>
    %230 = arith.mulf %226, %225 : vector<8x64xf32>
    %231 = arith.addf %229, %230 : vector<8x64xf32>
    %232 = math.tanh %231 : vector<8x64xf32>
    %233 = arith.mulf %228, %232 : vector<8x64xf32>
    %234 = vector.extract_strided_slice %191 {offsets = [16, 0], sizes = [8, 256], strides = [1, 1]} : vector<64x256xf32> to vector<8x256xf32>
    %235 = vector.extract_strided_slice %192 {offsets = [40, 0], sizes = [8, 256], strides = [1, 1]} : vector<64x256xf32> to vector<8x256xf32>
    %236 = arith.addf %234, %235 : vector<8x256xf32>
    %cst_51 = arith.constant dense<0.000000e+00> : vector<8x256xf32>
    %237 = tpu.matmul %233, %187, %cst_51 {dimension_numbers = #tpu.dot_dimension_numbers<[1], [0], [0], [1], [0, 0, 1, 1], [], []>} : vector<8x64xf32>, vector<64x256xf32>, vector<8x256xf32> -> vector<8x256xf32>
    %238 = arith.addf %237, %236 : vector<8x256xf32>
    %239 = vector.extract_strided_slice %238 {offsets = [0, 0], sizes = [8, 192], strides = [1, 1]} : vector<8x256xf32> to vector<8x192xf32>
    %240 = arith.negf %239 : vector<8x192xf32>
    %241 = math.exp %240 : vector<8x192xf32>
    %cst_52 = arith.constant 1.000000e+00 : f32
    %242 = vector.broadcast %cst_52 : f32 to vector<8x192xf32>
    %243 = arith.addf %242, %241 : vector<8x192xf32>
    %244 = arith.divf %242, %243 : vector<8x192xf32>
    %245 = vector.extract_strided_slice %238 {offsets = [0, 192], sizes = [8, 64], strides = [1, 1]} : vector<8x256xf32> to vector<8x64xf32>
    %246 = math.tanh %245 : vector<8x64xf32>
    %247 = vector.extract_strided_slice %244 {offsets = [0, 0], sizes = [8, 64], strides = [1, 1]} : vector<8x192xf32> to vector<8x64xf32>
    %248 = vector.extract_strided_slice %244 {offsets = [0, 64], sizes = [8, 64], strides = [1, 1]} : vector<8x192xf32> to vector<8x64xf32>
    %249 = vector.extract_strided_slice %244 {offsets = [0, 128], sizes = [8, 64], strides = [1, 1]} : vector<8x192xf32> to vector<8x64xf32>
    %250 = arith.mulf %248, %231 : vector<8x64xf32>
    %251 = arith.mulf %247, %246 : vector<8x64xf32>
    %252 = arith.addf %250, %251 : vector<8x64xf32>
    %253 = math.tanh %252 : vector<8x64xf32>
    %254 = arith.mulf %249, %253 : vector<8x64xf32>
    %255 = vector.extract_strided_slice %191 {offsets = [24, 0], sizes = [8, 256], strides = [1, 1]} : vector<64x256xf32> to vector<8x256xf32>
    %256 = vector.extract_strided_slice %192 {offsets = [32, 0], sizes = [8, 256], strides = [1, 1]} : vector<64x256xf32> to vector<8x256xf32>
    %257 = arith.addf %255, %256 : vector<8x256xf32>
    %cst_53 = arith.constant dense<0.000000e+00> : vector<8x256xf32>
    %258 = tpu.matmul %254, %187, %cst_53 {dimension_numbers = #tpu.dot_dimension_numbers<[1], [0], [0], [1], [0, 0, 1, 1], [], []>} : vector<8x64xf32>, vector<64x256xf32>, vector<8x256xf32> -> vector<8x256xf32>
    %259 = arith.addf %258, %257 : vector<8x256xf32>
    %260 = vector.extract_strided_slice %259 {offsets = [0, 0], sizes = [8, 192], strides = [1, 1]} : vector<8x256xf32> to vector<8x192xf32>
    %261 = arith.negf %260 : vector<8x192xf32>
    %262 = math.exp %261 : vector<8x192xf32>
    %cst_54 = arith.constant 1.000000e+00 : f32
    %263 = vector.broadcast %cst_54 : f32 to vector<8x192xf32>
    %264 = arith.addf %263, %262 : vector<8x192xf32>
    %265 = arith.divf %263, %264 : vector<8x192xf32>
    %266 = vector.extract_strided_slice %259 {offsets = [0, 192], sizes = [8, 64], strides = [1, 1]} : vector<8x256xf32> to vector<8x64xf32>
    %267 = math.tanh %266 : vector<8x64xf32>
    %268 = vector.extract_strided_slice %265 {offsets = [0, 0], sizes = [8, 64], strides = [1, 1]} : vector<8x192xf32> to vector<8x64xf32>
    %269 = vector.extract_strided_slice %265 {offsets = [0, 64], sizes = [8, 64], strides = [1, 1]} : vector<8x192xf32> to vector<8x64xf32>
    %270 = vector.extract_strided_slice %265 {offsets = [0, 128], sizes = [8, 64], strides = [1, 1]} : vector<8x192xf32> to vector<8x64xf32>
    %271 = arith.mulf %269, %252 : vector<8x64xf32>
    %272 = arith.mulf %268, %267 : vector<8x64xf32>
    %273 = arith.addf %271, %272 : vector<8x64xf32>
    %274 = math.tanh %273 : vector<8x64xf32>
    %275 = arith.mulf %270, %274 : vector<8x64xf32>
    %276 = vector.extract_strided_slice %191 {offsets = [32, 0], sizes = [8, 256], strides = [1, 1]} : vector<64x256xf32> to vector<8x256xf32>
    %277 = vector.extract_strided_slice %192 {offsets = [24, 0], sizes = [8, 256], strides = [1, 1]} : vector<64x256xf32> to vector<8x256xf32>
    %278 = arith.addf %276, %277 : vector<8x256xf32>
    %cst_55 = arith.constant dense<0.000000e+00> : vector<8x256xf32>
    %279 = tpu.matmul %275, %187, %cst_55 {dimension_numbers = #tpu.dot_dimension_numbers<[1], [0], [0], [1], [0, 0, 1, 1], [], []>} : vector<8x64xf32>, vector<64x256xf32>, vector<8x256xf32> -> vector<8x256xf32>
    %280 = arith.addf %279, %278 : vector<8x256xf32>
    %281 = vector.extract_strided_slice %280 {offsets = [0, 0], sizes = [8, 192], strides = [1, 1]} : vector<8x256xf32> to vector<8x192xf32>
    %282 = arith.negf %281 : vector<8x192xf32>
    %283 = math.exp %282 : vector<8x192xf32>
    %cst_56 = arith.constant 1.000000e+00 : f32
    %284 = vector.broadcast %cst_56 : f32 to vector<8x192xf32>
    %285 = arith.addf %284, %283 : vector<8x192xf32>
    %286 = arith.divf %284, %285 : vector<8x192xf32>
    %287 = vector.extract_strided_slice %280 {offsets = [0, 192], sizes = [8, 64], strides = [1, 1]} : vector<8x256xf32> to vector<8x64xf32>
    %288 = math.tanh %287 : vector<8x64xf32>
    %289 = vector.extract_strided_slice %286 {offsets = [0, 0], sizes = [8, 64], strides = [1, 1]} : vector<8x192xf32> to vector<8x64xf32>
    %290 = vector.extract_strided_slice %286 {offsets = [0, 64], sizes = [8, 64], strides = [1, 1]} : vector<8x192xf32> to vector<8x64xf32>
    %291 = vector.extract_strided_slice %286 {offsets = [0, 128], sizes = [8, 64], strides = [1, 1]} : vector<8x192xf32> to vector<8x64xf32>
    %292 = arith.mulf %290, %273 : vector<8x64xf32>
    %293 = arith.mulf %289, %288 : vector<8x64xf32>
    %294 = arith.addf %292, %293 : vector<8x64xf32>
    %295 = math.tanh %294 : vector<8x64xf32>
    %296 = arith.mulf %291, %295 : vector<8x64xf32>
    %297 = vector.extract_strided_slice %191 {offsets = [40, 0], sizes = [8, 256], strides = [1, 1]} : vector<64x256xf32> to vector<8x256xf32>
    %298 = vector.extract_strided_slice %192 {offsets = [16, 0], sizes = [8, 256], strides = [1, 1]} : vector<64x256xf32> to vector<8x256xf32>
    %299 = arith.addf %297, %298 : vector<8x256xf32>
    %cst_57 = arith.constant dense<0.000000e+00> : vector<8x256xf32>
    %300 = tpu.matmul %296, %187, %cst_57 {dimension_numbers = #tpu.dot_dimension_numbers<[1], [0], [0], [1], [0, 0, 1, 1], [], []>} : vector<8x64xf32>, vector<64x256xf32>, vector<8x256xf32> -> vector<8x256xf32>
    %301 = arith.addf %300, %299 : vector<8x256xf32>
    %302 = vector.extract_strided_slice %301 {offsets = [0, 0], sizes = [8, 192], strides = [1, 1]} : vector<8x256xf32> to vector<8x192xf32>
    %303 = arith.negf %302 : vector<8x192xf32>
    %304 = math.exp %303 : vector<8x192xf32>
    %cst_58 = arith.constant 1.000000e+00 : f32
    %305 = vector.broadcast %cst_58 : f32 to vector<8x192xf32>
    %306 = arith.addf %305, %304 : vector<8x192xf32>
    %307 = arith.divf %305, %306 : vector<8x192xf32>
    %308 = vector.extract_strided_slice %301 {offsets = [0, 192], sizes = [8, 64], strides = [1, 1]} : vector<8x256xf32> to vector<8x64xf32>
    %309 = math.tanh %308 : vector<8x64xf32>
    %310 = vector.extract_strided_slice %307 {offsets = [0, 0], sizes = [8, 64], strides = [1, 1]} : vector<8x192xf32> to vector<8x64xf32>
    %311 = vector.extract_strided_slice %307 {offsets = [0, 64], sizes = [8, 64], strides = [1, 1]} : vector<8x192xf32> to vector<8x64xf32>
    %312 = vector.extract_strided_slice %307 {offsets = [0, 128], sizes = [8, 64], strides = [1, 1]} : vector<8x192xf32> to vector<8x64xf32>
    %313 = arith.mulf %311, %294 : vector<8x64xf32>
    %314 = arith.mulf %310, %309 : vector<8x64xf32>
    %315 = arith.addf %313, %314 : vector<8x64xf32>
    %316 = math.tanh %315 : vector<8x64xf32>
    %317 = arith.mulf %312, %316 : vector<8x64xf32>
    %318 = vector.extract_strided_slice %191 {offsets = [48, 0], sizes = [8, 256], strides = [1, 1]} : vector<64x256xf32> to vector<8x256xf32>
    %319 = vector.extract_strided_slice %192 {offsets = [8, 0], sizes = [8, 256], strides = [1, 1]} : vector<64x256xf32> to vector<8x256xf32>
    %320 = arith.addf %318, %319 : vector<8x256xf32>
    %cst_59 = arith.constant dense<0.000000e+00> : vector<8x256xf32>
    %321 = tpu.matmul %317, %187, %cst_59 {dimension_numbers = #tpu.dot_dimension_numbers<[1], [0], [0], [1], [0, 0, 1, 1], [], []>} : vector<8x64xf32>, vector<64x256xf32>, vector<8x256xf32> -> vector<8x256xf32>
    %322 = arith.addf %321, %320 : vector<8x256xf32>
    %323 = vector.extract_strided_slice %322 {offsets = [0, 0], sizes = [8, 192], strides = [1, 1]} : vector<8x256xf32> to vector<8x192xf32>
    %324 = arith.negf %323 : vector<8x192xf32>
    %325 = math.exp %324 : vector<8x192xf32>
    %cst_60 = arith.constant 1.000000e+00 : f32
    %326 = vector.broadcast %cst_60 : f32 to vector<8x192xf32>
    %327 = arith.addf %326, %325 : vector<8x192xf32>
    %328 = arith.divf %326, %327 : vector<8x192xf32>
    %329 = vector.extract_strided_slice %322 {offsets = [0, 192], sizes = [8, 64], strides = [1, 1]} : vector<8x256xf32> to vector<8x64xf32>
    %330 = math.tanh %329 : vector<8x64xf32>
    %331 = vector.extract_strided_slice %328 {offsets = [0, 0], sizes = [8, 64], strides = [1, 1]} : vector<8x192xf32> to vector<8x64xf32>
    %332 = vector.extract_strided_slice %328 {offsets = [0, 64], sizes = [8, 64], strides = [1, 1]} : vector<8x192xf32> to vector<8x64xf32>
    %333 = vector.extract_strided_slice %328 {offsets = [0, 128], sizes = [8, 64], strides = [1, 1]} : vector<8x192xf32> to vector<8x64xf32>
    %334 = arith.mulf %332, %315 : vector<8x64xf32>
    %335 = arith.mulf %331, %330 : vector<8x64xf32>
    %336 = arith.addf %334, %335 : vector<8x64xf32>
    %337 = math.tanh %336 : vector<8x64xf32>
    %338 = arith.mulf %333, %337 : vector<8x64xf32>
    %339 = vector.extract_strided_slice %191 {offsets = [56, 0], sizes = [8, 256], strides = [1, 1]} : vector<64x256xf32> to vector<8x256xf32>
    %340 = vector.extract_strided_slice %192 {offsets = [0, 0], sizes = [8, 256], strides = [1, 1]} : vector<64x256xf32> to vector<8x256xf32>
    %341 = arith.addf %339, %340 : vector<8x256xf32>
    %cst_61 = arith.constant dense<0.000000e+00> : vector<8x256xf32>
    %342 = tpu.matmul %338, %187, %cst_61 {dimension_numbers = #tpu.dot_dimension_numbers<[1], [0], [0], [1], [0, 0, 1, 1], [], []>} : vector<8x64xf32>, vector<64x256xf32>, vector<8x256xf32> -> vector<8x256xf32>
    %343 = arith.addf %342, %341 : vector<8x256xf32>
    %344 = vector.extract_strided_slice %343 {offsets = [0, 0], sizes = [8, 192], strides = [1, 1]} : vector<8x256xf32> to vector<8x192xf32>
    %345 = arith.negf %344 : vector<8x192xf32>
    %346 = math.exp %345 : vector<8x192xf32>
    %cst_62 = arith.constant 1.000000e+00 : f32
    %347 = vector.broadcast %cst_62 : f32 to vector<8x192xf32>
    %348 = arith.addf %347, %346 : vector<8x192xf32>
    %349 = arith.divf %347, %348 : vector<8x192xf32>
    %350 = vector.extract_strided_slice %343 {offsets = [0, 192], sizes = [8, 64], strides = [1, 1]} : vector<8x256xf32> to vector<8x64xf32>
    %351 = math.tanh %350 : vector<8x64xf32>
    %352 = vector.extract_strided_slice %349 {offsets = [0, 0], sizes = [8, 64], strides = [1, 1]} : vector<8x192xf32> to vector<8x64xf32>
    %353 = vector.extract_strided_slice %349 {offsets = [0, 64], sizes = [8, 64], strides = [1, 1]} : vector<8x192xf32> to vector<8x64xf32>
    %354 = vector.extract_strided_slice %349 {offsets = [0, 128], sizes = [8, 64], strides = [1, 1]} : vector<8x192xf32> to vector<8x64xf32>
    %355 = arith.mulf %353, %336 : vector<8x64xf32>
    %356 = arith.mulf %352, %351 : vector<8x64xf32>
    %357 = arith.addf %355, %356 : vector<8x64xf32>
    %358 = math.tanh %357 : vector<8x64xf32>
    %359 = arith.mulf %354, %358 : vector<8x64xf32>
    %c0_63 = arith.constant 0 : index
    %c0_64 = arith.constant 0 : index
    %360 = vector.load %arg9[%c0_63, %c0_64] : memref<1x64xf32, #tpu.memory_space<vmem>>, vector<1x64xf32>
    %361 = vector.extract_strided_slice %359 {offsets = [0, 0], sizes = [8, 32], strides = [1, 1]} : vector<8x64xf32> to vector<8x32xf32>
    %362 = vector.extract_strided_slice %212 {offsets = [0, 32], sizes = [8, 32], strides = [1, 1]} : vector<8x64xf32> to vector<8x32xf32>
    %363 = vector.extract_strided_slice %360 {offsets = [0, 0], sizes = [1, 32], strides = [1, 1]} : vector<1x64xf32> to vector<1x32xf32>
    %364 = vector.broadcast %363 : vector<1x32xf32> to vector<8x32xf32>
    %365 = arith.mulf %361, %364 : vector<8x32xf32>
    %cst_65 = arith.constant dense<0.000000e+00> : vector<8xf32>
    %366 = vector.multi_reduction <add>, %365, %cst_65 [1] : vector<8x32xf32> to vector<8xf32>
    %367 = vector.shape_cast %366 : vector<8xf32> to vector<8x1xf32>
    %368 = vector.extract_strided_slice %360 {offsets = [0, 32], sizes = [1, 32], strides = [1, 1]} : vector<1x64xf32> to vector<1x32xf32>
    %369 = vector.broadcast %368 : vector<1x32xf32> to vector<8x32xf32>
    %370 = arith.mulf %362, %369 : vector<8x32xf32>
    %cst_66 = arith.constant dense<0.000000e+00> : vector<8xf32>
    %371 = vector.multi_reduction <add>, %370, %cst_66 [1] : vector<8x32xf32> to vector<8xf32>
    %372 = vector.shape_cast %371 : vector<8xf32> to vector<8x1xf32>
    %373 = arith.addf %367, %372 : vector<8x1xf32>
    %c0_67 = arith.constant 0 : index
    %c0_68 = arith.constant 0 : index
    %374 = vector.load %arg10[%c0_67, %c0_68] : memref<1x1xf32, #tpu.memory_space<vmem>>, vector<1x1xf32>
    %375 = vector.broadcast %374 : vector<1x1xf32> to vector<8x1xf32>
    %376 = arith.addf %373, %375 : vector<8x1xf32>
    %c0_69 = arith.constant 0 : index
    %c0_70 = arith.constant 0 : index
    %377 = vector.load %arg11[%c0_69, %c0_70] : memref<8x1xf32, #tpu.memory_space<vmem>>, vector<8x1xf32>
    tpu.vector_store %arg11[%c0_69, %c0_70], %376 {strides = array<i32>} : memref<8x1xf32, #tpu.memory_space<vmem>>, vector<8x1xf32>,
    return
  }
}

</mosaic_0001>

<llo_original>
// kernel: lstm_forward.1
$region0: #{lstm_forward.1}
  #allocation0 [shape = 'u32[]', space=smem, size = 0x4, offset = 0x4, fixed_abs, tag = 'smem constant byte address 0x4 - core index']
  #allocation1 [shape = 'u32[72,128]{1,0:T(1,128)}', space=vmem, size = 0x9000, scoped, tag = 'internal scratch']
  #allocation2 [shape = 'f32[64,64]{1,0:T(8,128)}', space=vmem, size = 0x8000, scoped, tag = 'scratch operand']
  #allocation3 [shape = 'f32[1,1]{1,0:T(1,128)S(1)}', space=vmem, size = 0x200, scoped, tag = 'scoped memory for lstm_forward.1']
  %s0 = inlined_call_operand.vmem [shape: f32[64,16], index: 0, kind: input, shape index: {}]
  %s1 = inlined_call_operand.hbm [shape: f32[16,256], index: 1, kind: input, shape index: {}]
  %s2 = inlined_call_operand.hbm [shape: f32[16,256], index: 2, kind: input, shape index: {}]
  %s3 = inlined_call_operand.vmem [shape: f32[64,256], index: 3, kind: input, shape index: {}]
  %s4 = inlined_call_operand.vmem [shape: f32[1,256], index: 4, kind: input, shape index: {}]
  %s5 = inlined_call_operand.hbm [shape: f32[64,256], index: 5, kind: input, shape index: {}]
  %s6 = inlined_call_operand.hbm [shape: f32[64,256], index: 6, kind: input, shape index: {}]
  %s7 = inlined_call_operand.hbm [shape: f32[64,256], index: 7, kind: input, shape index: {}]
  %s8 = inlined_call_operand.vmem [shape: f32[1,256], index: 8, kind: input, shape index: {}]
  %s9 = inlined_call_operand.vmem [shape: f32[1,64], index: 9, kind: input, shape index: {}]
  %s10 = inlined_call_operand.<no memory space> [shape: f32[1,1], index: 10, kind: input, shape index: {}]
  %s11 = inlined_call_operand.vmem [shape: f32[8,1], index: 11, kind: output, shape index: {}]
  %s12 = sld [smem:[#allocation0]]
  $region74: #{lstm_forward.1} parent=0
    _
  %s14 = ssub.s32 1, %s12
  %s15 = scalar_select 0, %s14, %s12
  %v16 = vstv %s10
  %17 = vst [vmem:[#allocation3] sm:$0x1] %v16
  $region1: #{lstm_forward.1} parent=0
    #allocation4 [shape = 'u8[16384]{0}', space=vmem, size = 0x4000, scoped, tag = 'input window, operand 1, single buffered']
    #allocation5 [shape = 's32[1]{0}', space=sflag, size = 0x4, scoped, tag = 'scoped memory for lstm_forward.1']
    #allocation6 [shape = 'u8[16384]{0}', space=vmem, size = 0x4000, scoped, tag = 'input window, operand 2, single buffered']
    #allocation7 [shape = 's32[1]{0}', space=sflag, size = 0x4, scoped, tag = 'scoped memory for lstm_forward.1']
    #allocation8 [shape = 'u8[65536]{0}', space=vmem, size = 0x10000, scoped, tag = 'input window, operand 5, single buffered']
    #allocation9 [shape = 'u8[65536]{0}', space=vmem, size = 0x10000, scoped, tag = 'input window, operand 6, single buffered']
    #allocation10 [shape = 's32[1]{0}', space=sflag, size = 0x4, scoped, tag = 'scoped memory for lstm_forward.1']
    #allocation11 [shape = 'u8[65536]{0}', space=vmem, size = 0x10000, scoped, tag = 'input window, operand 7, single buffered']
    %18 = vsyncpa [#allocation5], 0
    %19 = vsyncpa [#allocation7], 0
    %20 = vsyncpa [#allocation10], 0
    // Predicated region
    $region2: #{lstm_forward.1} parent=1 // pred_check
      _
    $region3: #{lstm_forward.1} parent=1 // pred_check_branch
      %22 = sbr.rel (0) target = $region5
    $region4: #{lstm_forward.1} parent=1 // pred_region
      _
    $region5: #{lstm_forward.1} parent=1 // pred_fallthru
      _
    // Predicated region
    $region6: #{lstm_forward.1} parent=1 // pred_check
      _
    $region7: #{lstm_forward.1} parent=1 // pred_check_branch
      %24 = sbr.rel (0) target = $region9
    $region8: #{lstm_forward.1} parent=1 // pred_region
      %26 = vsyncadd [#allocation5], 0
      %s27 = sshll.u32 %s1, 4
      %s28 = int_to_ptr.hbm [resolvable:$true] %s27
      %s29 = sshll.u32 [#allocation4], 4
      %s30 = int_to_ptr.vmem [resolvable:$true] %s29
      %35 = dma.hbm_to_vmem [thread:$0]  %s28, 512, %s30, [#allocation5], 256, 256, 16
    $region9: #{lstm_forward.1} parent=1 // pred_fallthru
      _
    // Predicated region
    $region10: #{lstm_forward.1} parent=1 // pred_check
      _
    $region11: #{lstm_forward.1} parent=1 // pred_check_branch
      %37 = sbr.rel (0) target = $region13
    $region12: #{lstm_forward.1} parent=1 // pred_region
      %39 = vsyncadd [#allocation7], 0
      %s40 = sshll.u32 %s2, 4
      %s41 = int_to_ptr.hbm [resolvable:$true] %s40
      %s42 = sshll.u32 [#allocation6], 4
      %s43 = int_to_ptr.vmem [resolvable:$true] %s42
      %48 = dma.hbm_to_vmem [thread:$0]  %s41, 512, %s43, [#allocation7], 256, 256, 16
    $region13: #{lstm_forward.1} parent=1 // pred_fallthru
      _
    // Predicated region
    $region14: #{lstm_forward.1} parent=1 // pred_check
      _
    $region15: #{lstm_forward.1} parent=1 // pred_check_branch
      %50 = sbr.rel (0) target = $region17
    $region16: #{lstm_forward.1} parent=1 // pred_region
      _
    $region17: #{lstm_forward.1} parent=1 // pred_fallthru
      _
    // Predicated region
    $region18: #{lstm_forward.1} parent=1 // pred_check
      _
    $region19: #{lstm_forward.1} parent=1 // pred_check_branch
      %52 = sbr.rel (0) target = $region21
    $region20: #{lstm_forward.1} parent=1 // pred_region
      _
    $region21: #{lstm_forward.1} parent=1 // pred_fallthru
      _
    // Predicated region
    $region22: #{lstm_forward.1} parent=1 // pred_check
      _
    $region23: #{lstm_forward.1} parent=1 // pred_check_branch
      %54 = sbr.rel (0) target = $region25
    $region24: #{lstm_forward.1} parent=1 // pred_region
      %56 = vsyncadd [#allocation7], 0
      %s57 = sshll.u32 %s5, 4
      %s58 = int_to_ptr.hbm [resolvable:$true] %s57
      %s59 = sshll.u32 [#allocation8], 4
      %s60 = int_to_ptr.vmem [resolvable:$true] %s59
      %65 = dma.hbm_to_vmem [thread:$0]  %s58, 2048, %s60, [#allocation7], 256, 256, 16
    $region25: #{lstm_forward.1} parent=1 // pred_fallthru
      _
    // Predicated region
    $region26: #{lstm_forward.1} parent=1 // pred_check
      _
    $region27: #{lstm_forward.1} parent=1 // pred_check_branch
      %67 = sbr.rel (0) target = $region29
    $region28: #{lstm_forward.1} parent=1 // pred_region
      %69 = vsyncadd [#allocation10], 0
      %s70 = sshll.u32 %s6, 4
      %s71 = int_to_ptr.hbm [resolvable:$true] %s70
      %s72 = sshll.u32 [#allocation9], 4
      %s73 = int_to_ptr.vmem [resolvable:$true] %s72
      %78 = dma.hbm_to_vmem [thread:$0]  %s71, 2048, %s73, [#allocation10], 256, 256, 16
    $region29: #{lstm_forward.1} parent=1 // pred_fallthru
      _
    // Predicated region
    $region30: #{lstm_forward.1} parent=1 // pred_check
      _
    $region31: #{lstm_forward.1} parent=1 // pred_check_branch
      %80 = sbr.rel (0) target = $region33
    $region32: #{lstm_forward.1} parent=1 // pred_region
      %82 = vsyncadd [#allocation10], 0
      %s83 = sshll.u32 %s7, 4
      %s84 = int_to_ptr.hbm [resolvable:$true] %s83
      %s85 = sshll.u32 [#allocation11], 4
      %s86 = int_to_ptr.vmem [resolvable:$true] %s85
      %91 = dma.hbm_to_vmem [thread:$0]  %s84, 2048, %s86, [#allocation10], 256, 256, 16
    $region33: #{lstm_forward.1} parent=1 // pred_fallthru
      _
    // Predicated region
    $region34: #{lstm_forward.1} parent=1 // pred_check
      _
    $region35: #{lstm_forward.1} parent=1 // pred_check_branch
      %93 = sbr.rel (0) target = $region37
    $region36: #{lstm_forward.1} parent=1 // pred_region
      _
    $region37: #{lstm_forward.1} parent=1 // pred_fallthru
      _
    // Predicated region
    $region38: #{lstm_forward.1} parent=1 // pred_check
      _
    $region39: #{lstm_forward.1} parent=1 // pred_check_branch
      %95 = sbr.rel (0) target = $region41
    $region40: #{lstm_forward.1} parent=1 // pred_region
      _
    $region41: #{lstm_forward.1} parent=1 // pred_fallthru
      _
    // Predicated region
    $region42: #{lstm_forward.1} parent=1 // pred_check
      _
    $region43: #{lstm_forward.1} parent=1 // pred_check_branch
      %97 = sbr.rel (0) target = $region45
    $region44: #{lstm_forward.1} parent=1 // pred_region
      _
    $region45: #{lstm_forward.1} parent=1 // pred_fallthru
      _
    // Predicated region
    $region46: #{lstm_forward.1} parent=1 // pred_check
      _
    $region47: #{lstm_forward.1} parent=1 // pred_check_branch
      %99 = sbr.rel (0) target = $region49
    $region48: #{lstm_forward.1} parent=1 // pred_region
      %101 = dma.done [#allocation5], 512
    $region49: #{lstm_forward.1} parent=1 // pred_fallthru
      _
    // Predicated region
    $region50: #{lstm_forward.1} parent=1 // pred_check
      _
    $region51: #{lstm_forward.1} parent=1 // pred_check_branch
      %103 = sbr.rel (0) target = $region53
    $region52: #{lstm_forward.1} parent=1 // pred_region
      %105 = dma.done [#allocation7], 512
    $region53: #{lstm_forward.1} parent=1 // pred_fallthru
      _
    // Predicated region
    $region54: #{lstm_forward.1} parent=1 // pred_check
      _
    $region55: #{lstm_forward.1} parent=1 // pred_check_branch
      %107 = sbr.rel (0) target = $region57
    $region56: #{lstm_forward.1} parent=1 // pred_region
      %109 = dma.done [#allocation7], 2048
    $region57: #{lstm_forward.1} parent=1 // pred_fallthru
      _
    // Predicated region
    $region58: #{lstm_forward.1} parent=1 // pred_check
      _
    $region59: #{lstm_forward.1} parent=1 // pred_check_branch
      %111 = sbr.rel (0) target = $region61
    $region60: #{lstm_forward.1} parent=1 // pred_region
      %113 = dma.done [#allocation10], 2048
    $region61: #{lstm_forward.1} parent=1 // pred_fallthru
      _
    // Predicated region
    $region62: #{lstm_forward.1} parent=1 // pred_check
      _
    $region63: #{lstm_forward.1} parent=1 // pred_check_branch
      %115 = sbr.rel (0) target = $region65
    $region64: #{lstm_forward.1} parent=1 // pred_region
      %117 = dma.done [#allocation10], 2048
    $region65: #{lstm_forward.1} parent=1 // pred_fallthru
      _
    %v118 = vld [vmem:[%s0] sm:$0xff]
    %v119 = vld [vmem:[%s0 + $0x8] sm:$0xff]
    %v120 = vld [vmem:[%s0 + $0x10] sm:$0xff]
    %v121 = vld [vmem:[%s0 + $0x18] sm:$0xff]
    %v122 = vld [vmem:[%s0 + $0x20] sm:$0xff]
    %v123 = vld [vmem:[%s0 + $0x28] sm:$0xff]
    %v124 = vld [vmem:[%s0 + $0x30] sm:$0xff]
    %v125 = vld [vmem:[%s0 + $0x38] sm:$0xff]
    %v126 = vld [vmem:[#allocation4] sm:$0xff]
    %v127 = vld [vmem:[#allocation4 + $0x8] sm:$0xff]
    %v128 = vld [vmem:[#allocation4 + $0x10] sm:$0xff]
    %v129 = vld [vmem:[#allocation4 + $0x18] sm:$0xff]
    %v130 = vld [vmem:[#allocation6] sm:$0xff]
    %v131 = vld [vmem:[#allocation6 + $0x8] sm:$0xff]
    %v132 = vld [vmem:[#allocation6 + $0x10] sm:$0xff]
    %v133 = vld [vmem:[#allocation6 + $0x18] sm:$0xff]
    %v134 = vld [vmem:[%s3] sm:$0xff]
    %v135 = vld [vmem:[%s3 + $0x8] sm:$0xff]
    %v136 = vld [vmem:[%s3 + $0x10] sm:$0xff]
    %v137 = vld [vmem:[%s3 + $0x18] sm:$0xff]
    %v138 = vld [vmem:[%s3 + $0x20] sm:$0xff]
    %v139 = vld [vmem:[%s3 + $0x28] sm:$0xff]
    %v140 = vld [vmem:[%s3 + $0x30] sm:$0xff]
    %v141 = vld [vmem:[%s3 + $0x38] sm:$0xff]
    %v142 = vld [vmem:[%s3 + $0x40] sm:$0xff]
    %v143 = vld [vmem:[%s3 + $0x48] sm:$0xff]
    %v144 = vld [vmem:[%s3 + $0x50] sm:$0xff]
    %v145 = vld [vmem:[%s3 + $0x58] sm:$0xff]
    %v146 = vld [vmem:[%s3 + $0x60] sm:$0xff]
    %v147 = vld [vmem:[%s3 + $0x68] sm:$0xff]
    %v148 = vld [vmem:[%s3 + $0x70] sm:$0xff]
    %v149 = vld [vmem:[%s3 + $0x78] sm:$0xff]
    %v150 = vld [vmem:[%s4] sm:$0x3]
    %v152 = vperm.slane %v150, 0
    %v153 = vperm.slane %v150, 1
    %vm156 = vcmask 130048
    %v158 = vsel %vm156, %v118, 0
    %v161 = vsel %vm156, %v119, 0
    %v164 = vsel %vm156, %v120, 0
    %v167 = vsel %vm156, %v121, 0
    %v170 = vsel %vm156, %v122, 0
    %v173 = vsel %vm156, %v123, 0
    %v176 = vsel %vm156, %v124, 0
    %v179 = vsel %vm156, %v125, 0
    %181 = vmatpush.msra.mxu0 0.0
    %182 = vmatpush.msra.mxu0 0.0
    %183 = vmatpush.msra.mxu0 0.0
    %184 = vmatpush.msra.mxu0 0.0
    %185 = vmatpush.msra.mxu0 0.0
    %186 = vmatpush.msra.mxu0 0.0
    %187 = vmatpush.msra.mxu0 0.0
    %188 = vmatpush.msra.mxu0 0.0
    %189 = vmatpush.msra.mxu0 0.0
    %190 = vmatpush.msra.mxu0 0.0
    %191 = vmatpush.msra.mxu0 0.0
    %192 = vmatpush.msra.mxu0 0.0
    %193 = vmatpush.msra.mxu0 0.0
    %194 = vmatpush.msra.mxu0 0.0
    %195 = vmatpush.msra.mxu0 %v128
    %196 = vmatpush.msra.mxu0 %v126
    %197 = vmatmul.f32.gmra.mxu0 %v158
    %v198 = vpop.f32.mrf.mxu0
    %v199 = vadd.f32 %v152, %v198
    %200 = vmatmul.f32.gmra.mxu0 %v161
    %v201 = vpop.f32.mrf.mxu0
    %v202 = vadd.f32 %v152, %v201
    %203 = vmatmul.f32.gmra.mxu0 %v164
    %v204 = vpop.f32.mrf.mxu0
    %v205 = vadd.f32 %v152, %v204
    %206 = vmatmul.f32.gmra.mxu0 %v167
    %v207 = vpop.f32.mrf.mxu0
    %v208 = vadd.f32 %v152, %v207
    %209 = vmatmul.f32.gmra.mxu0 %v170
    %v210 = vpop.f32.mrf.mxu0
    %v211 = vadd.f32 %v152, %v210
    %212 = vmatmul.f32.gmra.mxu0 %v173
    %v213 = vpop.f32.mrf.mxu0
    %v214 = vadd.f32 %v152, %v213
    %215 = vmatmul.f32.gmra.mxu0 %v176
    %v216 = vpop.f32.mrf.mxu0
    %v217 = vadd.f32 %v152, %v216
    %218 = vmatmul.f32.gmra.mxu0 %v179
    %v219 = vpop.f32.mrf.mxu0
    %v220 = vadd.f32 %v152, %v219
    %221 = vdwg.mxu0
    %222 = vmatpush.msra.mxu0 0.0
    %223 = vmatpush.msra.mxu0 0.0
    %224 = vmatpush.msra.mxu0 0.0
    %225 = vmatpush.msra.mxu0 0.0
    %226 = vmatpush.msra.mxu0 0.0
    %227 = vmatpush.msra.mxu0 0.0
    %228 = vmatpush.msra.mxu0 0.0
    %229 = vmatpush.msra.mxu0 0.0
    %230 = vmatpush.msra.mxu0 0.0
    %231 = vmatpush.msra.mxu0 0.0
    %232 = vmatpush.msra.mxu0 0.0
    %233 = vmatpush.msra.mxu0 0.0
    %234 = vmatpush.msra.mxu0 0.0
    %235 = vmatpush.msra.mxu0 0.0
    %236 = vmatpush.msra.mxu0 %v129
    %237 = vmatpush.msra.mxu0 %v127
    %238 = vmatmul.f32.gmra.mxu0 %v158
    %v239 = vpop.f32.mrf.mxu0
    %v240 = vadd.f32 %v153, %v239
    %241 = vmatmul.f32.gmra.mxu0 %v161
    %v242 = vpop.f32.mrf.mxu0
    %v243 = vadd.f32 %v153, %v242
    %244 = vmatmul.f32.gmra.mxu0 %v164
    %v245 = vpop.f32.mrf.mxu0
    %v246 = vadd.f32 %v153, %v245
    %247 = vmatmul.f32.gmra.mxu0 %v167
    %v248 = vpop.f32.mrf.mxu0
    %v249 = vadd.f32 %v153, %v248
    %250 = vmatmul.f32.gmra.mxu0 %v170
    %v251 = vpop.f32.mrf.mxu0
    %v252 = vadd.f32 %v153, %v251
    %253 = vmatmul.f32.gmra.mxu0 %v173
    %v254 = vpop.f32.mrf.mxu0
    %v255 = vadd.f32 %v153, %v254
    %256 = vmatmul.f32.gmra.mxu0 %v176
    %v257 = vpop.f32.mrf.mxu0
    %v258 = vadd.f32 %v153, %v257
    %259 = vmatmul.f32.gmra.mxu0 %v179
    %v260 = vpop.f32.mrf.mxu0
    %v261 = vadd.f32 %v153, %v260
    %262 = vdwg.mxu0
    %263 = vmatpush.msra.mxu0 0.0
    %264 = vmatpush.msra.mxu0 0.0
    %265 = vmatpush.msra.mxu0 0.0
    %266 = vmatpush.msra.mxu0 0.0
    %267 = vmatpush.msra.mxu0 0.0
    %268 = vmatpush.msra.mxu0 0.0
    %269 = vmatpush.msra.mxu0 0.0
    %270 = vmatpush.msra.mxu0 0.0
    %271 = vmatpush.msra.mxu0 0.0
    %272 = vmatpush.msra.mxu0 0.0
    %273 = vmatpush.msra.mxu0 0.0
    %274 = vmatpush.msra.mxu0 0.0
    %275 = vmatpush.msra.mxu0 0.0
    %276 = vmatpush.msra.mxu0 0.0
    %277 = vmatpush.msra.mxu0 %v132
    %278 = vmatpush.msra.mxu0 %v130
    %279 = vmatmul.f32.gmra.mxu0 %v158
    %v280 = vpop.f32.mrf.mxu0
    %v281 = vadd.f32 0.0, %v280
    %282 = vmatmul.f32.gmra.mxu0 %v161
    %v283 = vpop.f32.mrf.mxu0
    %v284 = vadd.f32 0.0, %v283
    %285 = vmatmul.f32.gmra.mxu0 %v164
    %v286 = vpop.f32.mrf.mxu0
    %v287 = vadd.f32 0.0, %v286
    %288 = vmatmul.f32.gmra.mxu0 %v167
    %v289 = vpop.f32.mrf.mxu0
    %v290 = vadd.f32 0.0, %v289
    %291 = vmatmul.f32.gmra.mxu0 %v170
    %v292 = vpop.f32.mrf.mxu0
    %v293 = vadd.f32 0.0, %v292
    %294 = vmatmul.f32.gmra.mxu0 %v173
    %v295 = vpop.f32.mrf.mxu0
    %v296 = vadd.f32 0.0, %v295
    %297 = vmatmul.f32.gmra.mxu0 %v176
    %v298 = vpop.f32.mrf.mxu0
    %v299 = vadd.f32 0.0, %v298
    %300 = vmatmul.f32.gmra.mxu0 %v179
    %v301 = vpop.f32.mrf.mxu0
    %v302 = vadd.f32 0.0, %v301
    %303 = vdwg.mxu0
    %304 = vmatpush.msra.mxu0 0.0
    %305 = vmatpush.msra.mxu0 0.0
    %306 = vmatpush.msra.mxu0 0.0
    %307 = vmatpush.msra.mxu0 0.0
    %308 = vmatpush.msra.mxu0 0.0
    %309 = vmatpush.msra.mxu0 0.0
    %310 = vmatpush.msra.mxu0 0.0
    %311 = vmatpush.msra.mxu0 0.0
    %312 = vmatpush.msra.mxu0 0.0
    %313 = vmatpush.msra.mxu0 0.0
    %314 = vmatpush.msra.mxu0 0.0
    %315 = vmatpush.msra.mxu0 0.0
    %316 = vmatpush.msra.mxu0 0.0
    %317 = vmatpush.msra.mxu0 0.0
    %318 = vmatpush.msra.mxu0 %v133
    %319 = vmatpush.msra.mxu0 %v131
    %320 = vmatmul.f32.gmra.mxu0 %v158
    %v321 = vpop.f32.mrf.mxu0
    %v322 = vadd.f32 0.0, %v321
    %323 = vmatmul.f32.gmra.mxu0 %v161
    %v324 = vpop.f32.mrf.mxu0
    %v325 = vadd.f32 0.0, %v324
    %326 = vmatmul.f32.gmra.mxu0 %v164
    %v327 = vpop.f32.mrf.mxu0
    %v328 = vadd.f32 0.0, %v327
    %329 = vmatmul.f32.gmra.mxu0 %v167
    %v330 = vpop.f32.mrf.mxu0
    %v331 = vadd.f32 0.0, %v330
    %332 = vmatmul.f32.gmra.mxu0 %v170
    %v333 = vpop.f32.mrf.mxu0
    %v334 = vadd.f32 0.0, %v333
    %335 = vmatmul.f32.gmra.mxu0 %v173
    %v336 = vpop.f32.mrf.mxu0
    %v337 = vadd.f32 0.0, %v336
    %338 = vmatmul.f32.gmra.mxu0 %v176
    %v339 = vpop.f32.mrf.mxu0
    %v340 = vadd.f32 0.0, %v339
    %341 = vmatmul.f32.gmra.mxu0 %v179
    %v342 = vpop.f32.mrf.mxu0
    %v343 = vadd.f32 0.0, %v342
    %344 = vdwg.mxu0
    %v345 = vadd.f32 %v199, %v302
    %v346 = vadd.f32 %v240, %v343
    %v347 = vxor.u32 %v345, 2147483648
    %v348 = vxor.u32 %v346, 2147483648
    %v349 = vmul.f32 %v347, 1.442695
    %v350 = vpow.pop %v349
    %v351 = vmul.f32 %v348, 1.442695
    %v352 = vpow.pop %v351
    %v353 = vadd.f32 %v350, 1.0
    %v354 = vadd.f32 %v352, 1.0
    %v355 = vrcp.pop %v353
    %v356 = vmul.f32 %v353, %v355
    %v357 = vsub.f32 1.0, %v356
    %v358 = vmul.f32 %v355, %v357
    %v359 = vadd.f32 %v355, %v358
    %vm360 = vweird.f32 %v353
    %vm361 = vweird.f32 %v355
    %vm362 = vmor %vm360, %vm361
    %v363 = vsel %vm362, %v355, %v359
    %v364 = vand.u32 2147483647, %v353
    %vm365 = vcmp.eq.f32.partialorder %v364, 8.507059e+37
    %v366 = vand.u32 %v353, 2147483648
    %v367 = vor.u32 1.1754944e-38, %v366
    %v368 = vsel %vm365, %v367, %v363
    %v369 = vmul.f32 1.0, %v368
    %v370 = vrcp.pop %v354
    %v371 = vmul.f32 %v354, %v370
    %v372 = vsub.f32 1.0, %v371
    %v373 = vmul.f32 %v370, %v372
    %v374 = vadd.f32 %v370, %v373
    %vm375 = vweird.f32 %v354
    %vm376 = vweird.f32 %v370
    %vm377 = vmor %vm375, %vm376
    %v378 = vsel %vm377, %v370, %v374
    %v379 = vand.u32 2147483647, %v354
    %vm380 = vcmp.eq.f32.partialorder %v379, 8.507059e+37
    %v381 = vand.u32 %v354, 2147483648
    %v382 = vor.u32 1.1754944e-38, %v381
    %v383 = vsel %vm380, %v382, %v378
    %v384 = vmul.f32 1.0, %v383
    %v385 = vtanh.pop %v346
    %v386 = vmul.f32 %v369, 0.0
    %388 = vrot.lane.b32.xlu0 %v385, 64
    %v389 = vpop.permute.xlu0 %388
    %v391 = vmul.f32 %v369, %v389
    %393 = vrot.lane.b32.xlu0 %v391, 64
    %v394 = vpop.permute.xlu0 %393
    %v396 = vadd.f32 %v386, %v394
    %v397 = vtanh.pop %v396
    %399 = vrot.lane.b32.xlu0 %v397, 64
    %v400 = vpop.permute.xlu0 %399
    %v402 = vmul.f32 %v384, %v400
    %vm403 = vcmask 523264
    %404 = vst.msk [vmem:[#allocation2] sm:$0xff] %vm403, %v402
    %v405 = vadd.f32 %v202, %v299
    %v406 = vadd.f32 %v243, %v340
    %v408 = vsel %vm403, %v402, 0
    %410 = vmatpush.msra.mxu0 0.0
    %411 = vmatpush.msra.mxu0 0.0
    %412 = vmatpush.msra.mxu0 0.0
    %413 = vmatpush.msra.mxu0 0.0
    %414 = vmatpush.msra.mxu0 0.0
    %415 = vmatpush.msra.mxu0 0.0
    %416 = vmatpush.msra.mxu0 0.0
    %417 = vmatpush.msra.mxu0 0.0
    %418 = vmatpush.msra.mxu0 %v148
    %419 = vmatpush.msra.mxu0 %v146
    %420 = vmatpush.msra.mxu0 %v144
    %421 = vmatpush.msra.mxu0 %v142
    %422 = vmatpush.msra.mxu0 %v140
    %423 = vmatpush.msra.mxu0 %v138
    %424 = vmatpush.msra.mxu0 %v136
    %425 = vmatpush.msra.mxu0 %v134
    %426 = vmatmul.f32.gmra.mxu0 %v408
    %v427 = vpop.f32.mrf.mxu0
    %v428 = vadd.f32 %v405, %v427
    %429 = vdwg.mxu0
    %430 = vmatpush.msra.mxu0 0.0
    %431 = vmatpush.msra.mxu0 0.0
    %432 = vmatpush.msra.mxu0 0.0
    %433 = vmatpush.msra.mxu0 0.0
    %434 = vmatpush.msra.mxu0 0.0
    %435 = vmatpush.msra.mxu0 0.0
    %436 = vmatpush.msra.mxu0 0.0
    %437 = vmatpush.msra.mxu0 0.0
    %438 = vmatpush.msra.mxu0 %v149
    %439 = vmatpush.msra.mxu0 %v147
    %440 = vmatpush.msra.mxu0 %v145
    %441 = vmatpush.msra.mxu0 %v143
    %442 = vmatpush.msra.mxu0 %v141
    %443 = vmatpush.msra.mxu0 %v139
    %444 = vmatpush.msra.mxu0 %v137
    %445 = vmatpush.msra.mxu0 %v135
    %446 = vmatmul.f32.gmra.mxu0 %v408
    %v447 = vpop.f32.mrf.mxu0
    %v448 = vadd.f32 %v406, %v447
    %449 = vdwg.mxu0
    %v450 = vxor.u32 %v428, 2147483648
    %v451 = vxor.u32 %v448, 2147483648
    %v452 = vmul.f32 %v450, 1.442695
    %v453 = vpow.pop %v452
    %v454 = vmul.f32 %v451, 1.442695
    %v455 = vpow.pop %v454
    %v456 = vadd.f32 %v453, 1.0
    %v457 = vadd.f32 %v455, 1.0
    %v458 = vrcp.pop %v456
    %v459 = vmul.f32 %v456, %v458
    %v460 = vsub.f32 1.0, %v459
    %v461 = vmul.f32 %v458, %v460
    %v462 = vadd.f32 %v458, %v461
    %vm463 = vweird.f32 %v456
    %vm464 = vweird.f32 %v458
    %vm465 = vmor %vm463, %vm464
    %v466 = vsel %vm465, %v458, %v462
    %v467 = vand.u32 2147483647, %v456
    %vm468 = vcmp.eq.f32.partialorder %v467, 8.507059e+37
    %v469 = vand.u32 %v456, 2147483648
    %v470 = vor.u32 1.1754944e-38, %v469
    %v471 = vsel %vm468, %v470, %v466
    %v472 = vmul.f32 1.0, %v471
    %v473 = vrcp.pop %v457
    %v474 = vmul.f32 %v457, %v473
    %v475 = vsub.f32 1.0, %v474
    %v476 = vmul.f32 %v473, %v475
    %v477 = vadd.f32 %v473, %v476
    %vm478 = vweird.f32 %v457
    %vm479 = vweird.f32 %v473
    %vm480 = vmor %vm478, %vm479
    %v481 = vsel %vm480, %v473, %v477
    %v482 = vand.u32 2147483647, %v457
    %vm483 = vcmp.eq.f32.partialorder %v482, 8.507059e+37
    %v484 = vand.u32 %v457, 2147483648
    %v485 = vor.u32 1.1754944e-38, %v484
    %v486 = vsel %vm483, %v485, %v481
    %v487 = vmul.f32 1.0, %v486
    %v488 = vtanh.pop %v448
    %v489 = vmul.f32 %v472, %v396
    %491 = vrot.lane.b32.xlu0 %v488, 64
    %v492 = vpop.permute.xlu0 %491
    %v494 = vmul.f32 %v472, %v492
    %496 = vrot.lane.b32.xlu0 %v494, 64
    %v497 = vpop.permute.xlu0 %496
    %v499 = vadd.f32 %v489, %v497
    %v500 = vtanh.pop %v499
    %502 = vrot.lane.b32.xlu0 %v500, 64
    %v503 = vpop.permute.xlu0 %502
    %v505 = vmul.f32 %v487, %v503
    %506 = vst.msk [vmem:[#allocation2 + $0x8] sm:$0xff] %vm403, %v505
    %v507 = vadd.f32 %v205, %v296
    %v508 = vadd.f32 %v246, %v337
    %v510 = vsel %vm403, %v505, 0
    %512 = vmatpush.msra.mxu0 0.0
    %513 = vmatpush.msra.mxu0 0.0
    %514 = vmatpush.msra.mxu0 0.0
    %515 = vmatpush.msra.mxu0 0.0
    %516 = vmatpush.msra.mxu0 0.0
    %517 = vmatpush.msra.mxu0 0.0
    %518 = vmatpush.msra.mxu0 0.0
    %519 = vmatpush.msra.mxu0 0.0
    %520 = vmatpush.msra.mxu0 %v148
    %521 = vmatpush.msra.mxu0 %v146
    %522 = vmatpush.msra.mxu0 %v144
    %523 = vmatpush.msra.mxu0 %v142
    %524 = vmatpush.msra.mxu0 %v140
    %525 = vmatpush.msra.mxu0 %v138
    %526 = vmatpush.msra.mxu0 %v136
    %527 = vmatpush.msra.mxu0 %v134
    %528 = vmatmul.f32.gmra.mxu0 %v510
    %v529 = vpop.f32.mrf.mxu0
    %v530 = vadd.f32 %v507, %v529
    %531 = vdwg.mxu0
    %532 = vmatpush.msra.mxu0 0.0
    %533 = vmatpush.msra.mxu0 0.0
    %534 = vmatpush.msra.mxu0 0.0
    %535 = vmatpush.msra.mxu0 0.0
    %536 = vmatpush.msra.mxu0 0.0
    %537 = vmatpush.msra.mxu0 0.0
    %538 = vmatpush.msra.mxu0 0.0
    %539 = vmatpush.msra.mxu0 0.0
    %540 = vmatpush.msra.mxu0 %v149
    %541 = vmatpush.msra.mxu0 %v147
    %542 = vmatpush.msra.mxu0 %v145
    %543 = vmatpush.msra.mxu0 %v143
    %544 = vmatpush.msra.mxu0 %v141
    %545 = vmatpush.msra.mxu0 %v139
    %546 = vmatpush.msra.mxu0 %v137
    %547 = vmatpush.msra.mxu0 %v135
    %548 = vmatmul.f32.gmra.mxu0 %v510
    %v549 = vpop.f32.mrf.mxu0
    %v550 = vadd.f32 %v508, %v549
    %551 = vdwg.mxu0
    %v552 = vxor.u32 %v530, 2147483648
    %v553 = vxor.u32 %v550, 2147483648
    %v554 = vmul.f32 %v552, 1.442695
    %v555 = vpow.pop %v554
    %v556 = vmul.f32 %v553, 1.442695
    %v557 = vpow.pop %v556
    %v558 = vadd.f32 %v555, 1.0
    %v559 = vadd.f32 %v557, 1.0
    %v560 = vrcp.pop %v558
    %v561 = vmul.f32 %v558, %v560
    %v562 = vsub.f32 1.0, %v561
    %v563 = vmul.f32 %v560, %v562
    %v564 = vadd.f32 %v560, %v563
    %vm565 = vweird.f32 %v558
    %vm566 = vweird.f32 %v560
    %vm567 = vmor %vm565, %vm566
    %v568 = vsel %vm567, %v560, %v564
    %v569 = vand.u32 2147483647, %v558
    %vm570 = vcmp.eq.f32.partialorder %v569, 8.507059e+37
    %v571 = vand.u32 %v558, 2147483648
    %v572 = vor.u32 1.1754944e-38, %v571
    %v573 = vsel %vm570, %v572, %v568
    %v574 = vmul.f32 1.0, %v573
    %v575 = vrcp.pop %v559
    %v576 = vmul.f32 %v559, %v575
    %v577 = vsub.f32 1.0, %v576
    %v578 = vmul.f32 %v575, %v577
    %v579 = vadd.f32 %v575, %v578
    %vm580 = vweird.f32 %v559
    %vm581 = vweird.f32 %v575
    %vm582 = vmor %vm580, %vm581
    %v583 = vsel %vm582, %v575, %v579
    %v584 = vand.u32 2147483647, %v559
    %vm585 = vcmp.eq.f32.partialorder %v584, 8.507059e+37
    %v586 = vand.u32 %v559, 2147483648
    %v587 = vor.u32 1.1754944e-38, %v586
    %v588 = vsel %vm585, %v587, %v583
    %v589 = vmul.f32 1.0, %v588
    %v590 = vtanh.pop %v550
    %v591 = vmul.f32 %v574, %v499
    %593 = vrot.lane.b32.xlu0 %v590, 64
    %v594 = vpop.permute.xlu0 %593
    %v596 = vmul.f32 %v574, %v594
    %598 = vrot.lane.b32.xlu0 %v596, 64
    %v599 = vpop.permute.xlu0 %598
    %v601 = vadd.f32 %v591, %v599
    %v602 = vtanh.pop %v601
    %604 = vrot.lane.b32.xlu0 %v602, 64
    %v605 = vpop.permute.xlu0 %604
    %v607 = vmul.f32 %v589, %v605
    %608 = vst.msk [vmem:[#allocation2 + $0x10] sm:$0xff] %vm403, %v607
    %v609 = vadd.f32 %v208, %v293
    %v610 = vadd.f32 %v249, %v334
    %v612 = vsel %vm403, %v607, 0
    %614 = vmatpush.msra.mxu0 0.0
    %615 = vmatpush.msra.mxu0 0.0
    %616 = vmatpush.msra.mxu0 0.0
    %617 = vmatpush.msra.mxu0 0.0
    %618 = vmatpush.msra.mxu0 0.0
    %619 = vmatpush.msra.mxu0 0.0
    %620 = vmatpush.msra.mxu0 0.0
    %621 = vmatpush.msra.mxu0 0.0
    %622 = vmatpush.msra.mxu0 %v148
    %623 = vmatpush.msra.mxu0 %v146
    %624 = vmatpush.msra.mxu0 %v144
    %625 = vmatpush.msra.mxu0 %v142
    %626 = vmatpush.msra.mxu0 %v140
    %627 = vmatpush.msra.mxu0 %v138
    %628 = vmatpush.msra.mxu0 %v136
    %629 = vmatpush.msra.mxu0 %v134
    %630 = vmatmul.f32.gmra.mxu0 %v612
    %v631 = vpop.f32.mrf.mxu0
    %v632 = vadd.f32 %v609, %v631
    %633 = vdwg.mxu0
    %634 = vmatpush.msra.mxu0 0.0
    %635 = vmatpush.msra.mxu0 0.0
    %636 = vmatpush.msra.mxu0 0.0
    %637 = vmatpush.msra.mxu0 0.0
    %638 = vmatpush.msra.mxu0 0.0
    %639 = vmatpush.msra.mxu0 0.0
    %640 = vmatpush.msra.mxu0 0.0
    %641 = vmatpush.msra.mxu0 0.0
    %642 = vmatpush.msra.mxu0 %v149
    %643 = vmatpush.msra.mxu0 %v147
    %644 = vmatpush.msra.mxu0 %v145
    %645 = vmatpush.msra.mxu0 %v143
    %646 = vmatpush.msra.mxu0 %v141
    %647 = vmatpush.msra.mxu0 %v139
    %648 = vmatpush.msra.mxu0 %v137
    %649 = vmatpush.msra.mxu0 %v135
    %650 = vmatmul.f32.gmra.mxu0 %v612
    %v651 = vpop.f32.mrf.mxu0
    %v652 = vadd.f32 %v610, %v651
    %653 = vdwg.mxu0
    %v654 = vxor.u32 %v632, 2147483648
    %v655 = vxor.u32 %v652, 2147483648
    %v656 = vmul.f32 %v654, 1.442695
    %v657 = vpow.pop %v656
    %v658 = vmul.f32 %v655, 1.442695
    %v659 = vpow.pop %v658
    %v660 = vadd.f32 %v657, 1.0
    %v661 = vadd.f32 %v659, 1.0
    %v662 = vrcp.pop %v660
    %v663 = vmul.f32 %v660, %v662
    %v664 = vsub.f32 1.0, %v663
    %v665 = vmul.f32 %v662, %v664
    %v666 = vadd.f32 %v662, %v665
    %vm667 = vweird.f32 %v660
    %vm668 = vweird.f32 %v662
    %vm669 = vmor %vm667, %vm668
    %v670 = vsel %vm669, %v662, %v666
    %v671 = vand.u32 2147483647, %v660
    %vm672 = vcmp.eq.f32.partialorder %v671, 8.507059e+37
    %v673 = vand.u32 %v660, 2147483648
    %v674 = vor.u32 1.1754944e-38, %v673
    %v675 = vsel %vm672, %v674, %v670
    %v676 = vmul.f32 1.0, %v675
    %v677 = vrcp.pop %v661
    %v678 = vmul.f32 %v661, %v677
    %v679 = vsub.f32 1.0, %v678
    %v680 = vmul.f32 %v677, %v679
    %v681 = vadd.f32 %v677, %v680
    %vm682 = vweird.f32 %v661
    %vm683 = vweird.f32 %v677
    %vm684 = vmor %vm682, %vm683
    %v685 = vsel %vm684, %v677, %v681
    %v686 = vand.u32 2147483647, %v661
    %vm687 = vcmp.eq.f32.partialorder %v686, 8.507059e+37
    %v688 = vand.u32 %v661, 2147483648
    %v689 = vor.u32 1.1754944e-38, %v688
    %v690 = vsel %vm687, %v689, %v685
    %v691 = vmul.f32 1.0, %v690
    %v692 = vtanh.pop %v652
    %v693 = vmul.f32 %v676, %v601
    %695 = vrot.lane.b32.xlu0 %v692, 64
    %v696 = vpop.permute.xlu0 %695
    %v698 = vmul.f32 %v676, %v696
    %700 = vrot.lane.b32.xlu0 %v698, 64
    %v701 = vpop.permute.xlu0 %700
    %v703 = vadd.f32 %v693, %v701
    %v704 = vtanh.pop %v703
    %706 = vrot.lane.b32.xlu0 %v704, 64
    %v707 = vpop.permute.xlu0 %706
    %v709 = vmul.f32 %v691, %v707
    %710 = vst.msk [vmem:[#allocation2 + $0x18] sm:$0xff] %vm403, %v709
    %v711 = vadd.f32 %v211, %v290
    %v712 = vadd.f32 %v252, %v331
    %v714 = vsel %vm403, %v709, 0
    %716 = vmatpush.msra.mxu0 0.0
    %717 = vmatpush.msra.mxu0 0.0
    %718 = vmatpush.msra.mxu0 0.0
    %719 = vmatpush.msra.mxu0 0.0
    %720 = vmatpush.msra.mxu0 0.0
    %721 = vmatpush.msra.mxu0 0.0
    %722 = vmatpush.msra.mxu0 0.0
    %723 = vmatpush.msra.mxu0 0.0
    %724 = vmatpush.msra.mxu0 %v148
    %725 = vmatpush.msra.mxu0 %v146
    %726 = vmatpush.msra.mxu0 %v144
    %727 = vmatpush.msra.mxu0 %v142
    %728 = vmatpush.msra.mxu0 %v140
    %729 = vmatpush.msra.mxu0 %v138
    %730 = vmatpush.msra.mxu0 %v136
    %731 = vmatpush.msra.mxu0 %v134
    %732 = vmatmul.f32.gmra.mxu0 %v714
    %v733 = vpop.f32.mrf.mxu0
    %v734 = vadd.f32 %v711, %v733
    %735 = vdwg.mxu0
    %736 = vmatpush.msra.mxu0 0.0
    %737 = vmatpush.msra.mxu0 0.0
    %738 = vmatpush.msra.mxu0 0.0
    %739 = vmatpush.msra.mxu0 0.0
    %740 = vmatpush.msra.mxu0 0.0
    %741 = vmatpush.msra.mxu0 0.0
    %742 = vmatpush.msra.mxu0 0.0
    %743 = vmatpush.msra.mxu0 0.0
    %744 = vmatpush.msra.mxu0 %v149
    %745 = vmatpush.msra.mxu0 %v147
    %746 = vmatpush.msra.mxu0 %v145
    %747 = vmatpush.msra.mxu0 %v143
    %748 = vmatpush.msra.mxu0 %v141
    %749 = vmatpush.msra.mxu0 %v139
    %750 = vmatpush.msra.mxu0 %v137
    %751 = vmatpush.msra.mxu0 %v135
    %752 = vmatmul.f32.gmra.mxu0 %v714
    %v753 = vpop.f32.mrf.mxu0
    %v754 = vadd.f32 %v712, %v753
    %755 = vdwg.mxu0
    %v756 = vxor.u32 %v734, 2147483648
    %v757 = vxor.u32 %v754, 2147483648
    %v758 = vmul.f32 %v756, 1.442695
    %v759 = vpow.pop %v758
    %v760 = vmul.f32 %v757, 1.442695
    %v761 = vpow.pop %v760
    %v762 = vadd.f32 %v759, 1.0
    %v763 = vadd.f32 %v761, 1.0
    %v764 = vrcp.pop %v762
    %v765 = vmul.f32 %v762, %v764
    %v766 = vsub.f32 1.0, %v765
    %v767 = vmul.f32 %v764, %v766
    %v768 = vadd.f32 %v764, %v767
    %vm769 = vweird.f32 %v762
    %vm770 = vweird.f32 %v764
    %vm771 = vmor %vm769, %vm770
    %v772 = vsel %vm771, %v764, %v768
    %v773 = vand.u32 2147483647, %v762
    %vm774 = vcmp.eq.f32.partialorder %v773, 8.507059e+37
    %v775 = vand.u32 %v762, 2147483648
    %v776 = vor.u32 1.1754944e-38, %v775
    %v777 = vsel %vm774, %v776, %v772
    %v778 = vmul.f32 1.0, %v777
    %v779 = vrcp.pop %v763
    %v780 = vmul.f32 %v763, %v779
    %v781 = vsub.f32 1.0, %v780
    %v782 = vmul.f32 %v779, %v781
    %v783 = vadd.f32 %v779, %v782
    %vm784 = vweird.f32 %v763
    %vm785 = vweird.f32 %v779
    %vm786 = vmor %vm784, %vm785
    %v787 = vsel %vm786, %v779, %v783
    %v788 = vand.u32 2147483647, %v763
    %vm789 = vcmp.eq.f32.partialorder %v788, 8.507059e+37
    %v790 = vand.u32 %v763, 2147483648
    %v791 = vor.u32 1.1754944e-38, %v790
    %v792 = vsel %vm789, %v791, %v787
    %v793 = vmul.f32 1.0, %v792
    %v794 = vtanh.pop %v754
    %v795 = vmul.f32 %v778, %v703
    %797 = vrot.lane.b32.xlu0 %v794, 64
    %v798 = vpop.permute.xlu0 %797
    %v800 = vmul.f32 %v778, %v798
    %802 = vrot.lane.b32.xlu0 %v800, 64
    %v803 = vpop.permute.xlu0 %802
    %v805 = vadd.f32 %v795, %v803
    %v806 = vtanh.pop %v805
    %808 = vrot.lane.b32.xlu0 %v806, 64
    %v809 = vpop.permute.xlu0 %808
    %v811 = vmul.f32 %v793, %v809
    %812 = vst.msk [vmem:[#allocation2 + $0x20] sm:$0xff] %vm403, %v811
    %v813 = vadd.f32 %v214, %v287
    %v814 = vadd.f32 %v255, %v328
    %v816 = vsel %vm403, %v811, 0
    %818 = vmatpush.msra.mxu0 0.0
    %819 = vmatpush.msra.mxu0 0.0
    %820 = vmatpush.msra.mxu0 0.0
    %821 = vmatpush.msra.mxu0 0.0
    %822 = vmatpush.msra.mxu0 0.0
    %823 = vmatpush.msra.mxu0 0.0
    %824 = vmatpush.msra.mxu0 0.0
    %825 = vmatpush.msra.mxu0 0.0
    %826 = vmatpush.msra.mxu0 %v148
    %827 = vmatpush.msra.mxu0 %v146
    %828 = vmatpush.msra.mxu0 %v144
    %829 = vmatpush.msra.mxu0 %v142
    %830 = vmatpush.msra.mxu0 %v140
    %831 = vmatpush.msra.mxu0 %v138
    %832 = vmatpush.msra.mxu0 %v136
    %833 = vmatpush.msra.mxu0 %v134
    %834 = vmatmul.f32.gmra.mxu0 %v816
    %v835 = vpop.f32.mrf.mxu0
    %v836 = vadd.f32 %v813, %v835
    %837 = vdwg.mxu0
    %838 = vmatpush.msra.mxu0 0.0
    %839 = vmatpush.msra.mxu0 0.0
    %840 = vmatpush.msra.mxu0 0.0
    %841 = vmatpush.msra.mxu0 0.0
    %842 = vmatpush.msra.mxu0 0.0
    %843 = vmatpush.msra.mxu0 0.0
    %844 = vmatpush.msra.mxu0 0.0
    %845 = vmatpush.msra.mxu0 0.0
    %846 = vmatpush.msra.mxu0 %v149
    %847 = vmatpush.msra.mxu0 %v147
    %848 = vmatpush.msra.mxu0 %v145
    %849 = vmatpush.msra.mxu0 %v143
    %850 = vmatpush.msra.mxu0 %v141
    %851 = vmatpush.msra.mxu0 %v139
    %852 = vmatpush.msra.mxu0 %v137
    %853 = vmatpush.msra.mxu0 %v135
    %854 = vmatmul.f32.gmra.mxu0 %v816
    %v855 = vpop.f32.mrf.mxu0
    %v856 = vadd.f32 %v814, %v855
    %857 = vdwg.mxu0
    %v858 = vxor.u32 %v836, 2147483648
    %v859 = vxor.u32 %v856, 2147483648
    %v860 = vmul.f32 %v858, 1.442695
    %v861 = vpow.pop %v860
    %v862 = vmul.f32 %v859, 1.442695
    %v863 = vpow.pop %v862
    %v864 = vadd.f32 %v861, 1.0
    %v865 = vadd.f32 %v863, 1.0
    %v866 = vrcp.pop %v864
    %v867 = vmul.f32 %v864, %v866
    %v868 = vsub.f32 1.0, %v867
    %v869 = vmul.f32 %v866, %v868
    %v870 = vadd.f32 %v866, %v869
    %vm871 = vweird.f32 %v864
    %vm872 = vweird.f32 %v866
    %vm873 = vmor %vm871, %vm872
    %v874 = vsel %vm873, %v866, %v870
    %v875 = vand.u32 2147483647, %v864
    %vm876 = vcmp.eq.f32.partialorder %v875, 8.507059e+37
    %v877 = vand.u32 %v864, 2147483648
    %v878 = vor.u32 1.1754944e-38, %v877
    %v879 = vsel %vm876, %v878, %v874
    %v880 = vmul.f32 1.0, %v879
    %v881 = vrcp.pop %v865
    %v882 = vmul.f32 %v865, %v881
    %v883 = vsub.f32 1.0, %v882
    %v884 = vmul.f32 %v881, %v883
    %v885 = vadd.f32 %v881, %v884
    %vm886 = vweird.f32 %v865
    %vm887 = vweird.f32 %v881
    %vm888 = vmor %vm886, %vm887
    %v889 = vsel %vm888, %v881, %v885
    %v890 = vand.u32 2147483647, %v865
    %vm891 = vcmp.eq.f32.partialorder %v890, 8.507059e+37
    %v892 = vand.u32 %v865, 2147483648
    %v893 = vor.u32 1.1754944e-38, %v892
    %v894 = vsel %vm891, %v893, %v889
    %v895 = vmul.f32 1.0, %v894
    %v896 = vtanh.pop %v856
    %v897 = vmul.f32 %v880, %v805
    %899 = vrot.lane.b32.xlu0 %v896, 64
    %v900 = vpop.permute.xlu0 %899
    %v902 = vmul.f32 %v880, %v900
    %904 = vrot.lane.b32.xlu0 %v902, 64
    %v905 = vpop.permute.xlu0 %904
    %v907 = vadd.f32 %v897, %v905
    %v908 = vtanh.pop %v907
    %910 = vrot.lane.b32.xlu0 %v908, 64
    %v911 = vpop.permute.xlu0 %910
    %v913 = vmul.f32 %v895, %v911
    %914 = vst.msk [vmem:[#allocation2 + $0x28] sm:$0xff] %vm403, %v913
    %v915 = vadd.f32 %v217, %v284
    %v916 = vadd.f32 %v258, %v325
    %v918 = vsel %vm403, %v913, 0
    %920 = vmatpush.msra.mxu0 0.0
    %921 = vmatpush.msra.mxu0 0.0
    %922 = vmatpush.msra.mxu0 0.0
    %923 = vmatpush.msra.mxu0 0.0
    %924 = vmatpush.msra.mxu0 0.0
    %925 = vmatpush.msra.mxu0 0.0
    %926 = vmatpush.msra.mxu0 0.0
    %927 = vmatpush.msra.mxu0 0.0
    %928 = vmatpush.msra.mxu0 %v148
    %929 = vmatpush.msra.mxu0 %v146
    %930 = vmatpush.msra.mxu0 %v144
    %931 = vmatpush.msra.mxu0 %v142
    %932 = vmatpush.msra.mxu0 %v140
    %933 = vmatpush.msra.mxu0 %v138
    %934 = vmatpush.msra.mxu0 %v136
    %935 = vmatpush.msra.mxu0 %v134
    %936 = vmatmul.f32.gmra.mxu0 %v918
    %v937 = vpop.f32.mrf.mxu0
    %v938 = vadd.f32 %v915, %v937
    %939 = vdwg.mxu0
    %940 = vmatpush.msra.mxu0 0.0
    %941 = vmatpush.msra.mxu0 0.0
    %942 = vmatpush.msra.mxu0 0.0
    %943 = vmatpush.msra.mxu0 0.0
    %944 = vmatpush.msra.mxu0 0.0
    %945 = vmatpush.msra.mxu0 0.0
    %946 = vmatpush.msra.mxu0 0.0
    %947 = vmatpush.msra.mxu0 0.0
    %948 = vmatpush.msra.mxu0 %v149
    %949 = vmatpush.msra.mxu0 %v147
    %950 = vmatpush.msra.mxu0 %v145
    %951 = vmatpush.msra.mxu0 %v143
    %952 = vmatpush.msra.mxu0 %v141
    %953 = vmatpush.msra.mxu0 %v139
    %954 = vmatpush.msra.mxu0 %v137
    %955 = vmatpush.msra.mxu0 %v135
    %956 = vmatmul.f32.gmra.mxu0 %v918
    %v957 = vpop.f32.mrf.mxu0
    %v958 = vadd.f32 %v916, %v957
    %959 = vdwg.mxu0
    %v960 = vxor.u32 %v938, 2147483648
    %v961 = vxor.u32 %v958, 2147483648
    %v962 = vmul.f32 %v960, 1.442695
    %v963 = vpow.pop %v962
    %v964 = vmul.f32 %v961, 1.442695
    %v965 = vpow.pop %v964
    %v966 = vadd.f32 %v963, 1.0
    %v967 = vadd.f32 %v965, 1.0
    %v968 = vrcp.pop %v966
    %v969 = vmul.f32 %v966, %v968
    %v970 = vsub.f32 1.0, %v969
    %v971 = vmul.f32 %v968, %v970
    %v972 = vadd.f32 %v968, %v971
    %vm973 = vweird.f32 %v966
    %vm974 = vweird.f32 %v968
    %vm975 = vmor %vm973, %vm974
    %v976 = vsel %vm975, %v968, %v972
    %v977 = vand.u32 2147483647, %v966
    %vm978 = vcmp.eq.f32.partialorder %v977, 8.507059e+37
    %v979 = vand.u32 %v966, 2147483648
    %v980 = vor.u32 1.1754944e-38, %v979
    %v981 = vsel %vm978, %v980, %v976
    %v982 = vmul.f32 1.0, %v981
    %v983 = vrcp.pop %v967
    %v984 = vmul.f32 %v967, %v983
    %v985 = vsub.f32 1.0, %v984
    %v986 = vmul.f32 %v983, %v985
    %v987 = vadd.f32 %v983, %v986
    %vm988 = vweird.f32 %v967
    %vm989 = vweird.f32 %v983
    %vm990 = vmor %vm988, %vm989
    %v991 = vsel %vm990, %v983, %v987
    %v992 = vand.u32 2147483647, %v967
    %vm993 = vcmp.eq.f32.partialorder %v992, 8.507059e+37
    %v994 = vand.u32 %v967, 2147483648
    %v995 = vor.u32 1.1754944e-38, %v994
    %v996 = vsel %vm993, %v995, %v991
    %v997 = vmul.f32 1.0, %v996
    %v998 = vtanh.pop %v958
    %v999 = vmul.f32 %v982, %v907
    %1001 = vrot.lane.b32.xlu0 %v998, 64
    %v1002 = vpop.permute.xlu0 %1001
    %v1004 = vmul.f32 %v982, %v1002
    %1006 = vrot.lane.b32.xlu0 %v1004, 64
    %v1007 = vpop.permute.xlu0 %1006
    %v1009 = vadd.f32 %v999, %v1007
    %v1010 = vtanh.pop %v1009
    %1012 = vrot.lane.b32.xlu0 %v1010, 64
    %v1013 = vpop.permute.xlu0 %1012
    %v1015 = vmul.f32 %v997, %v1013
    %1016 = vst.msk [vmem:[#allocation2 + $0x30] sm:$0xff] %vm403, %v1015
    %v1017 = vadd.f32 %v220, %v281
    %v1018 = vadd.f32 %v261, %v322
    %v1020 = vsel %vm403, %v1015, 0
    %1022 = vmatpush.msra.mxu0 0.0
    %1023 = vmatpush.msra.mxu0 0.0
    %1024 = vmatpush.msra.mxu0 0.0
    %1025 = vmatpush.msra.mxu0 0.0
    %1026 = vmatpush.msra.mxu0 0.0
    %1027 = vmatpush.msra.mxu0 0.0
    %1028 = vmatpush.msra.mxu0 0.0
    %1029 = vmatpush.msra.mxu0 0.0
    %1030 = vmatpush.msra.mxu0 %v148
    %1031 = vmatpush.msra.mxu0 %v146
    %1032 = vmatpush.msra.mxu0 %v144
    %1033 = vmatpush.msra.mxu0 %v142
    %1034 = vmatpush.msra.mxu0 %v140
    %1035 = vmatpush.msra.mxu0 %v138
    %1036 = vmatpush.msra.mxu0 %v136
    %1037 = vmatpush.msra.mxu0 %v134
    %1038 = vmatmul.f32.gmra.mxu0 %v1020
    %v1039 = vpop.f32.mrf.mxu0
    %v1040 = vadd.f32 %v1017, %v1039
    %1041 = vdwg.mxu0
    %1042 = vmatpush.msra.mxu0 0.0
    %1043 = vmatpush.msra.mxu0 0.0
    %1044 = vmatpush.msra.mxu0 0.0
    %1045 = vmatpush.msra.mxu0 0.0
    %1046 = vmatpush.msra.mxu0 0.0
    %1047 = vmatpush.msra.mxu0 0.0
    %1048 = vmatpush.msra.mxu0 0.0
    %1049 = vmatpush.msra.mxu0 0.0
    %1050 = vmatpush.msra.mxu0 %v149
    %1051 = vmatpush.msra.mxu0 %v147
    %1052 = vmatpush.msra.mxu0 %v145
    %1053 = vmatpush.msra.mxu0 %v143
    %1054 = vmatpush.msra.mxu0 %v141
    %1055 = vmatpush.msra.mxu0 %v139
    %1056 = vmatpush.msra.mxu0 %v137
    %1057 = vmatpush.msra.mxu0 %v135
    %1058 = vmatmul.f32.gmra.mxu0 %v1020
    %v1059 = vpop.f32.mrf.mxu0
    %v1060 = vadd.f32 %v1018, %v1059
    %1061 = vdwg.mxu0
    %v1062 = vxor.u32 %v1040, 2147483648
    %v1063 = vxor.u32 %v1060, 2147483648
    %v1064 = vmul.f32 %v1062, 1.442695
    %v1065 = vpow.pop %v1064
    %v1066 = vmul.f32 %v1063, 1.442695
    %v1067 = vpow.pop %v1066
    %v1068 = vadd.f32 %v1065, 1.0
    %v1069 = vadd.f32 %v1067, 1.0
    %v1070 = vrcp.pop %v1068
    %v1071 = vmul.f32 %v1068, %v1070
    %v1072 = vsub.f32 1.0, %v1071
    %v1073 = vmul.f32 %v1070, %v1072
    %v1074 = vadd.f32 %v1070, %v1073
    %vm1075 = vweird.f32 %v1068
    %vm1076 = vweird.f32 %v1070
    %vm1077 = vmor %vm1075, %vm1076
    %v1078 = vsel %vm1077, %v1070, %v1074
    %v1079 = vand.u32 2147483647, %v1068
    %vm1080 = vcmp.eq.f32.partialorder %v1079, 8.507059e+37
    %v1081 = vand.u32 %v1068, 2147483648
    %v1082 = vor.u32 1.1754944e-38, %v1081
    %v1083 = vsel %vm1080, %v1082, %v1078
    %v1084 = vmul.f32 1.0, %v1083
    %v1085 = vrcp.pop %v1069
    %v1086 = vmul.f32 %v1069, %v1085
    %v1087 = vsub.f32 1.0, %v1086
    %v1088 = vmul.f32 %v1085, %v1087
    %v1089 = vadd.f32 %v1085, %v1088
    %vm1090 = vweird.f32 %v1069
    %vm1091 = vweird.f32 %v1085
    %vm1092 = vmor %vm1090, %vm1091
    %v1093 = vsel %vm1092, %v1085, %v1089
    %v1094 = vand.u32 2147483647, %v1069
    %vm1095 = vcmp.eq.f32.partialorder %v1094, 8.507059e+37
    %v1096 = vand.u32 %v1069, 2147483648
    %v1097 = vor.u32 1.1754944e-38, %v1096
    %v1098 = vsel %vm1095, %v1097, %v1093
    %v1099 = vmul.f32 1.0, %v1098
    %v1100 = vtanh.pop %v1060
    %v1101 = vmul.f32 %v1084, %v1009
    %1103 = vrot.lane.b32.xlu0 %v1100, 64
    %v1104 = vpop.permute.xlu0 %1103
    %v1106 = vmul.f32 %v1084, %v1104
    %1108 = vrot.lane.b32.xlu0 %v1106, 64
    %v1109 = vpop.permute.xlu0 %1108
    %v1111 = vadd.f32 %v1101, %v1109
    %v1112 = vtanh.pop %v1111
    %1114 = vrot.lane.b32.xlu0 %v1112, 64
    %v1115 = vpop.permute.xlu0 %1114
    %v1117 = vmul.f32 %v1099, %v1115
    %1118 = vst.msk [vmem:[#allocation2 + $0x38] sm:$0xff] %vm403, %v1117
    %v1119 = vld [vmem:[#allocation2] sm:$0xff]
    %v1120 = vld [vmem:[#allocation2 + $0x8] sm:$0xff]
    %v1121 = vld [vmem:[#allocation2 + $0x10] sm:$0xff]
    %v1122 = vld [vmem:[#allocation2 + $0x18] sm:$0xff]
    %v1123 = vld [vmem:[#allocation2 + $0x20] sm:$0xff]
    %v1124 = vld [vmem:[#allocation2 + $0x28] sm:$0xff]
    %v1125 = vld [vmem:[#allocation2 + $0x30] sm:$0xff]
    %v1126 = vld [vmem:[#allocation2 + $0x38] sm:$0xff]
    %v1127 = vld [vmem:[#allocation8] sm:$0xff]
    %v1128 = vld [vmem:[#allocation8 + $0x8] sm:$0xff]
    %v1129 = vld [vmem:[#allocation8 + $0x10] sm:$0xff]
    %v1130 = vld [vmem:[#allocation8 + $0x18] sm:$0xff]
    %v1131 = vld [vmem:[#allocation8 + $0x20] sm:$0xff]
    %v1132 = vld [vmem:[#allocation8 + $0x28] sm:$0xff]
    %v1133 = vld [vmem:[#allocation8 + $0x30] sm:$0xff]
    %v1134 = vld [vmem:[#allocation8 + $0x38] sm:$0xff]
    %v1135 = vld [vmem:[#allocation8 + $0x40] sm:$0xff]
    %v1136 = vld [vmem:[#allocation8 + $0x48] sm:$0xff]
    %v1137 = vld [vmem:[#allocation8 + $0x50] sm:$0xff]
    %v1138 = vld [vmem:[#allocation8 + $0x58] sm:$0xff]
    %v1139 = vld [vmem:[#allocation8 + $0x60] sm:$0xff]
    %v1140 = vld [vmem:[#allocation8 + $0x68] sm:$0xff]
    %v1141 = vld [vmem:[#allocation8 + $0x70] sm:$0xff]
    %v1142 = vld [vmem:[#allocation8 + $0x78] sm:$0xff]
    %v1143 = vld [vmem:[#allocation9] sm:$0xff]
    %v1144 = vld [vmem:[#allocation9 + $0x8] sm:$0xff]
    %v1145 = vld [vmem:[#allocation9 + $0x10] sm:$0xff]
    %v1146 = vld [vmem:[#allocation9 + $0x18] sm:$0xff]
    %v1147 = vld [vmem:[#allocation9 + $0x20] sm:$0xff]
    %v1148 = vld [vmem:[#allocation9 + $0x28] sm:$0xff]
    %v1149 = vld [vmem:[#allocation9 + $0x30] sm:$0xff]
    %v1150 = vld [vmem:[#allocation9 + $0x38] sm:$0xff]
    %v1151 = vld [vmem:[#allocation9 + $0x40] sm:$0xff]
    %v1152 = vld [vmem:[#allocation9 + $0x48] sm:$0xff]
    %v1153 = vld [vmem:[#allocation9 + $0x50] sm:$0xff]
    %v1154 = vld [vmem:[#allocation9 + $0x58] sm:$0xff]
    %v1155 = vld [vmem:[#allocation9 + $0x60] sm:$0xff]
    %v1156 = vld [vmem:[#allocation9 + $0x68] sm:$0xff]
    %v1157 = vld [vmem:[#allocation9 + $0x70] sm:$0xff]
    %v1158 = vld [vmem:[#allocation9 + $0x78] sm:$0xff]
    %v1159 = vld [vmem:[#allocation11] sm:$0xff]
    %v1160 = vld [vmem:[#allocation11 + $0x8] sm:$0xff]
    %v1161 = vld [vmem:[#allocation11 + $0x10] sm:$0xff]
    %v1162 = vld [vmem:[#allocation11 + $0x18] sm:$0xff]
    %v1163 = vld [vmem:[#allocation11 + $0x20] sm:$0xff]
    %v1164 = vld [vmem:[#allocation11 + $0x28] sm:$0xff]
    %v1165 = vld [vmem:[#allocation11 + $0x30] sm:$0xff]
    %v1166 = vld [vmem:[#allocation11 + $0x38] sm:$0xff]
    %v1167 = vld [vmem:[#allocation11 + $0x40] sm:$0xff]
    %v1168 = vld [vmem:[#allocation11 + $0x48] sm:$0xff]
    %v1169 = vld [vmem:[#allocation11 + $0x50] sm:$0xff]
    %v1170 = vld [vmem:[#allocation11 + $0x58] sm:$0xff]
    %v1171 = vld [vmem:[#allocation11 + $0x60] sm:$0xff]
    %v1172 = vld [vmem:[#allocation11 + $0x68] sm:$0xff]
    %v1173 = vld [vmem:[#allocation11 + $0x70] sm:$0xff]
    %v1174 = vld [vmem:[#allocation11 + $0x78] sm:$0xff]
    %v1175 = vld [vmem:[%s8] sm:$0x3]
    %v1177 = vperm.slane %v1175, 0
    %v1178 = vperm.slane %v1175, 1
    %v1182 = vsel %vm403, %v1119, 0
    %v1185 = vsel %vm403, %v1120, 0
    %v1188 = vsel %vm403, %v1121, 0
    %v1191 = vsel %vm403, %v1122, 0
    %v1194 = vsel %vm403, %v1123, 0
    %v1197 = vsel %vm403, %v1124, 0
    %v1200 = vsel %vm403, %v1125, 0
    %v1203 = vsel %vm403, %v1126, 0
    %1205 = vmatpush.msra.mxu0 0.0
    %1206 = vmatpush.msra.mxu0 0.0
    %1207 = vmatpush.msra.mxu0 0.0
    %1208 = vmatpush.msra.mxu0 0.0
    %1209 = vmatpush.msra.mxu0 0.0
    %1210 = vmatpush.msra.mxu0 0.0
    %1211 = vmatpush.msra.mxu0 0.0
    %1212 = vmatpush.msra.mxu0 0.0
    %1213 = vmatpush.msra.mxu0 %v1141
    %1214 = vmatpush.msra.mxu0 %v1139
    %1215 = vmatpush.msra.mxu0 %v1137
    %1216 = vmatpush.msra.mxu0 %v1135
    %1217 = vmatpush.msra.mxu0 %v1133
    %1218 = vmatpush.msra.mxu0 %v1131
    %1219 = vmatpush.msra.mxu0 %v1129
    %1220 = vmatpush.msra.mxu0 %v1127
    %1221 = vmatmul.f32.gmra.mxu0 %v1182
    %v1222 = vpop.f32.mrf.mxu0
    %v1223 = vadd.f32 %v1177, %v1222
    %1224 = vmatmul.f32.gmra.mxu0 %v1185
    %v1225 = vpop.f32.mrf.mxu0
    %v1226 = vadd.f32 %v1177, %v1225
    %1227 = vmatmul.f32.gmra.mxu0 %v1188
    %v1228 = vpop.f32.mrf.mxu0
    %v1229 = vadd.f32 %v1177, %v1228
    %1230 = vmatmul.f32.gmra.mxu0 %v1191
    %v1231 = vpop.f32.mrf.mxu0
    %v1232 = vadd.f32 %v1177, %v1231
    %1233 = vmatmul.f32.gmra.mxu0 %v1194
    %v1234 = vpop.f32.mrf.mxu0
    %v1235 = vadd.f32 %v1177, %v1234
    %1236 = vmatmul.f32.gmra.mxu0 %v1197
    %v1237 = vpop.f32.mrf.mxu0
    %v1238 = vadd.f32 %v1177, %v1237
    %1239 = vmatmul.f32.gmra.mxu0 %v1200
    %v1240 = vpop.f32.mrf.mxu0
    %v1241 = vadd.f32 %v1177, %v1240
    %1242 = vmatmul.f32.gmra.mxu0 %v1203
    %v1243 = vpop.f32.mrf.mxu0
    %v1244 = vadd.f32 %v1177, %v1243
    %1245 = vdwg.mxu0
    %1246 = vmatpush.msra.mxu0 0.0
    %1247 = vmatpush.msra.mxu0 0.0
    %1248 = vmatpush.msra.mxu0 0.0
    %1249 = vmatpush.msra.mxu0 0.0
    %1250 = vmatpush.msra.mxu0 0.0
    %1251 = vmatpush.msra.mxu0 0.0
    %1252 = vmatpush.msra.mxu0 0.0
    %1253 = vmatpush.msra.mxu0 0.0
    %1254 = vmatpush.msra.mxu0 %v1142
    %1255 = vmatpush.msra.mxu0 %v1140
    %1256 = vmatpush.msra.mxu0 %v1138
    %1257 = vmatpush.msra.mxu0 %v1136
    %1258 = vmatpush.msra.mxu0 %v1134
    %1259 = vmatpush.msra.mxu0 %v1132
    %1260 = vmatpush.msra.mxu0 %v1130
    %1261 = vmatpush.msra.mxu0 %v1128
    %1262 = vmatmul.f32.gmra.mxu0 %v1182
    %v1263 = vpop.f32.mrf.mxu0
    %v1264 = vadd.f32 %v1178, %v1263
    %1265 = vmatmul.f32.gmra.mxu0 %v1185
    %v1266 = vpop.f32.mrf.mxu0
    %v1267 = vadd.f32 %v1178, %v1266
    %1268 = vmatmul.f32.gmra.mxu0 %v1188
    %v1269 = vpop.f32.mrf.mxu0
    %v1270 = vadd.f32 %v1178, %v1269
    %1271 = vmatmul.f32.gmra.mxu0 %v1191
    %v1272 = vpop.f32.mrf.mxu0
    %v1273 = vadd.f32 %v1178, %v1272
    %1274 = vmatmul.f32.gmra.mxu0 %v1194
    %v1275 = vpop.f32.mrf.mxu0
    %v1276 = vadd.f32 %v1178, %v1275
    %1277 = vmatmul.f32.gmra.mxu0 %v1197
    %v1278 = vpop.f32.mrf.mxu0
    %v1279 = vadd.f32 %v1178, %v1278
    %1280 = vmatmul.f32.gmra.mxu0 %v1200
    %v1281 = vpop.f32.mrf.mxu0
    %v1282 = vadd.f32 %v1178, %v1281
    %1283 = vmatmul.f32.gmra.mxu0 %v1203
    %v1284 = vpop.f32.mrf.mxu0
    %v1285 = vadd.f32 %v1178, %v1284
    %1286 = vdwg.mxu0
    %1287 = vmatpush.msra.mxu0 0.0
    %1288 = vmatpush.msra.mxu0 0.0
    %1289 = vmatpush.msra.mxu0 0.0
    %1290 = vmatpush.msra.mxu0 0.0
    %1291 = vmatpush.msra.mxu0 0.0
    %1292 = vmatpush.msra.mxu0 0.0
    %1293 = vmatpush.msra.mxu0 0.0
    %1294 = vmatpush.msra.mxu0 0.0
    %1295 = vmatpush.msra.mxu0 %v1157
    %1296 = vmatpush.msra.mxu0 %v1155
    %1297 = vmatpush.msra.mxu0 %v1153
    %1298 = vmatpush.msra.mxu0 %v1151
    %1299 = vmatpush.msra.mxu0 %v1149
    %1300 = vmatpush.msra.mxu0 %v1147
    %1301 = vmatpush.msra.mxu0 %v1145
    %1302 = vmatpush.msra.mxu0 %v1143
    %1303 = vmatmul.f32.gmra.mxu0 %v1182
    %v1304 = vpop.f32.mrf.mxu0
    %v1305 = vadd.f32 0.0, %v1304
    %1306 = vmatmul.f32.gmra.mxu0 %v1185
    %v1307 = vpop.f32.mrf.mxu0
    %v1308 = vadd.f32 0.0, %v1307
    %1309 = vmatmul.f32.gmra.mxu0 %v1188
    %v1310 = vpop.f32.mrf.mxu0
    %v1311 = vadd.f32 0.0, %v1310
    %1312 = vmatmul.f32.gmra.mxu0 %v1191
    %v1313 = vpop.f32.mrf.mxu0
    %v1314 = vadd.f32 0.0, %v1313
    %1315 = vmatmul.f32.gmra.mxu0 %v1194
    %v1316 = vpop.f32.mrf.mxu0
    %v1317 = vadd.f32 0.0, %v1316
    %1318 = vmatmul.f32.gmra.mxu0 %v1197
    %v1319 = vpop.f32.mrf.mxu0
    %v1320 = vadd.f32 0.0, %v1319
    %1321 = vmatmul.f32.gmra.mxu0 %v1200
    %v1322 = vpop.f32.mrf.mxu0
    %v1323 = vadd.f32 0.0, %v1322
    %1324 = vmatmul.f32.gmra.mxu0 %v1203
    %v1325 = vpop.f32.mrf.mxu0
    %v1326 = vadd.f32 0.0, %v1325
    %1327 = vdwg.mxu0
    %1328 = vmatpush.msra.mxu0 0.0
    %1329 = vmatpush.msra.mxu0 0.0
    %1330 = vmatpush.msra.mxu0 0.0
    %1331 = vmatpush.msra.mxu0 0.0
    %1332 = vmatpush.msra.mxu0 0.0
    %1333 = vmatpush.msra.mxu0 0.0
    %1334 = vmatpush.msra.mxu0 0.0
    %1335 = vmatpush.msra.mxu0 0.0
    %1336 = vmatpush.msra.mxu0 %v1158
    %1337 = vmatpush.msra.mxu0 %v1156
    %1338 = vmatpush.msra.mxu0 %v1154
    %1339 = vmatpush.msra.mxu0 %v1152
    %1340 = vmatpush.msra.mxu0 %v1150
    %1341 = vmatpush.msra.mxu0 %v1148
    %1342 = vmatpush.msra.mxu0 %v1146
    %1343 = vmatpush.msra.mxu0 %v1144
    %1344 = vmatmul.f32.gmra.mxu0 %v1182
    %v1345 = vpop.f32.mrf.mxu0
    %v1346 = vadd.f32 0.0, %v1345
    %1347 = vmatmul.f32.gmra.mxu0 %v1185
    %v1348 = vpop.f32.mrf.mxu0
    %v1349 = vadd.f32 0.0, %v1348
    %1350 = vmatmul.f32.gmra.mxu0 %v1188
    %v1351 = vpop.f32.mrf.mxu0
    %v1352 = vadd.f32 0.0, %v1351
    %1353 = vmatmul.f32.gmra.mxu0 %v1191
    %v1354 = vpop.f32.mrf.mxu0
    %v1355 = vadd.f32 0.0, %v1354
    %1356 = vmatmul.f32.gmra.mxu0 %v1194
    %v1357 = vpop.f32.mrf.mxu0
    %v1358 = vadd.f32 0.0, %v1357
    %1359 = vmatmul.f32.gmra.mxu0 %v1197
    %v1360 = vpop.f32.mrf.mxu0
    %v1361 = vadd.f32 0.0, %v1360
    %1362 = vmatmul.f32.gmra.mxu0 %v1200
    %v1363 = vpop.f32.mrf.mxu0
    %v1364 = vadd.f32 0.0, %v1363
    %1365 = vmatmul.f32.gmra.mxu0 %v1203
    %v1366 = vpop.f32.mrf.mxu0
    %v1367 = vadd.f32 0.0, %v1366
    %1368 = vdwg.mxu0
    %v1369 = vadd.f32 %v1223, %v1326
    %v1370 = vadd.f32 %v1264, %v1367
    %v1371 = vxor.u32 %v1369, 2147483648
    %v1372 = vxor.u32 %v1370, 2147483648
    %v1373 = vmul.f32 %v1371, 1.442695
    %v1374 = vpow.pop %v1373
    %v1375 = vmul.f32 %v1372, 1.442695
    %v1376 = vpow.pop %v1375
    %v1377 = vadd.f32 %v1374, 1.0
    %v1378 = vadd.f32 %v1376, 1.0
    %v1379 = vrcp.pop %v1377
    %v1380 = vmul.f32 %v1377, %v1379
    %v1381 = vsub.f32 1.0, %v1380
    %v1382 = vmul.f32 %v1379, %v1381
    %v1383 = vadd.f32 %v1379, %v1382
    %vm1384 = vweird.f32 %v1377
    %vm1385 = vweird.f32 %v1379
    %vm1386 = vmor %vm1384, %vm1385
    %v1387 = vsel %vm1386, %v1379, %v1383
    %v1388 = vand.u32 2147483647, %v1377
    %vm1389 = vcmp.eq.f32.partialorder %v1388, 8.507059e+37
    %v1390 = vand.u32 %v1377, 2147483648
    %v1391 = vor.u32 1.1754944e-38, %v1390
    %v1392 = vsel %vm1389, %v1391, %v1387
    %v1393 = vmul.f32 1.0, %v1392
    %v1394 = vrcp.pop %v1378
    %v1395 = vmul.f32 %v1378, %v1394
    %v1396 = vsub.f32 1.0, %v1395
    %v1397 = vmul.f32 %v1394, %v1396
    %v1398 = vadd.f32 %v1394, %v1397
    %vm1399 = vweird.f32 %v1378
    %vm1400 = vweird.f32 %v1394
    %vm1401 = vmor %vm1399, %vm1400
    %v1402 = vsel %vm1401, %v1394, %v1398
    %v1403 = vand.u32 2147483647, %v1378
    %vm1404 = vcmp.eq.f32.partialorder %v1403, 8.507059e+37
    %v1405 = vand.u32 %v1378, 2147483648
    %v1406 = vor.u32 1.1754944e-38, %v1405
    %v1407 = vsel %vm1404, %v1406, %v1402
    %v1408 = vmul.f32 1.0, %v1407
    %v1409 = vtanh.pop %v1370
    %v1410 = vmul.f32 %v1393, 0.0
    %1412 = vrot.lane.b32.xlu0 %v1409, 64
    %v1413 = vpop.permute.xlu0 %1412
    %v1415 = vmul.f32 %v1393, %v1413
    %1417 = vrot.lane.b32.xlu0 %v1415, 64
    %v1418 = vpop.permute.xlu0 %1417
    %v1420 = vadd.f32 %v1410, %v1418
    %v1421 = vtanh.pop %v1420
    %1423 = vrot.lane.b32.xlu0 %v1421, 64
    %v1424 = vpop.permute.xlu0 %1423
    %v1426 = vmul.f32 %v1408, %v1424
    %v1427 = vadd.f32 %v1226, %v1323
    %v1428 = vadd.f32 %v1267, %v1364
    %v1430 = vsel %vm403, %v1426, 0
    %1432 = vmatpush.msra.mxu0 0.0
    %1433 = vmatpush.msra.mxu0 0.0
    %1434 = vmatpush.msra.mxu0 0.0
    %1435 = vmatpush.msra.mxu0 0.0
    %1436 = vmatpush.msra.mxu0 0.0
    %1437 = vmatpush.msra.mxu0 0.0
    %1438 = vmatpush.msra.mxu0 0.0
    %1439 = vmatpush.msra.mxu0 0.0
    %1440 = vmatpush.msra.mxu0 %v1173
    %1441 = vmatpush.msra.mxu0 %v1171
    %1442 = vmatpush.msra.mxu0 %v1169
    %1443 = vmatpush.msra.mxu0 %v1167
    %1444 = vmatpush.msra.mxu0 %v1165
    %1445 = vmatpush.msra.mxu0 %v1163
    %1446 = vmatpush.msra.mxu0 %v1161
    %1447 = vmatpush.msra.mxu0 %v1159
    %1448 = vmatmul.f32.gmra.mxu0 %v1430
    %v1449 = vpop.f32.mrf.mxu0
    %v1450 = vadd.f32 %v1427, %v1449
    %1451 = vdwg.mxu0
    %1452 = vmatpush.msra.mxu0 0.0
    %1453 = vmatpush.msra.mxu0 0.0
    %1454 = vmatpush.msra.mxu0 0.0
    %1455 = vmatpush.msra.mxu0 0.0
    %1456 = vmatpush.msra.mxu0 0.0
    %1457 = vmatpush.msra.mxu0 0.0
    %1458 = vmatpush.msra.mxu0 0.0
    %1459 = vmatpush.msra.mxu0 0.0
    %1460 = vmatpush.msra.mxu0 %v1174
    %1461 = vmatpush.msra.mxu0 %v1172
    %1462 = vmatpush.msra.mxu0 %v1170
    %1463 = vmatpush.msra.mxu0 %v1168
    %1464 = vmatpush.msra.mxu0 %v1166
    %1465 = vmatpush.msra.mxu0 %v1164
    %1466 = vmatpush.msra.mxu0 %v1162
    %1467 = vmatpush.msra.mxu0 %v1160
    %1468 = vmatmul.f32.gmra.mxu0 %v1430
    %v1469 = vpop.f32.mrf.mxu0
    %v1470 = vadd.f32 %v1428, %v1469
    %1471 = vdwg.mxu0
    %v1472 = vxor.u32 %v1450, 2147483648
    %v1473 = vxor.u32 %v1470, 2147483648
    %v1474 = vmul.f32 %v1472, 1.442695
    %v1475 = vpow.pop %v1474
    %v1476 = vmul.f32 %v1473, 1.442695
    %v1477 = vpow.pop %v1476
    %v1478 = vadd.f32 %v1475, 1.0
    %v1479 = vadd.f32 %v1477, 1.0
    %v1480 = vrcp.pop %v1478
    %v1481 = vmul.f32 %v1478, %v1480
    %v1482 = vsub.f32 1.0, %v1481
    %v1483 = vmul.f32 %v1480, %v1482
    %v1484 = vadd.f32 %v1480, %v1483
    %vm1485 = vweird.f32 %v1478
    %vm1486 = vweird.f32 %v1480
    %vm1487 = vmor %vm1485, %vm1486
    %v1488 = vsel %vm1487, %v1480, %v1484
    %v1489 = vand.u32 2147483647, %v1478
    %vm1490 = vcmp.eq.f32.partialorder %v1489, 8.507059e+37
    %v1491 = vand.u32 %v1478, 2147483648
    %v1492 = vor.u32 1.1754944e-38, %v1491
    %v1493 = vsel %vm1490, %v1492, %v1488
    %v1494 = vmul.f32 1.0, %v1493
    %v1495 = vrcp.pop %v1479
    %v1496 = vmul.f32 %v1479, %v1495
    %v1497 = vsub.f32 1.0, %v1496
    %v1498 = vmul.f32 %v1495, %v1497
    %v1499 = vadd.f32 %v1495, %v1498
    %vm1500 = vweird.f32 %v1479
    %vm1501 = vweird.f32 %v1495
    %vm1502 = vmor %vm1500, %vm1501
    %v1503 = vsel %vm1502, %v1495, %v1499
    %v1504 = vand.u32 2147483647, %v1479
    %vm1505 = vcmp.eq.f32.partialorder %v1504, 8.507059e+37
    %v1506 = vand.u32 %v1479, 2147483648
    %v1507 = vor.u32 1.1754944e-38, %v1506
    %v1508 = vsel %vm1505, %v1507, %v1503
    %v1509 = vmul.f32 1.0, %v1508
    %v1510 = vtanh.pop %v1470
    %v1511 = vmul.f32 %v1494, %v1420
    %1513 = vrot.lane.b32.xlu0 %v1510, 64
    %v1514 = vpop.permute.xlu0 %1513
    %v1516 = vmul.f32 %v1494, %v1514
    %1518 = vrot.lane.b32.xlu0 %v1516, 64
    %v1519 = vpop.permute.xlu0 %1518
    %v1521 = vadd.f32 %v1511, %v1519
    %v1522 = vtanh.pop %v1521
    %1524 = vrot.lane.b32.xlu0 %v1522, 64
    %v1525 = vpop.permute.xlu0 %1524
    %v1527 = vmul.f32 %v1509, %v1525
    %v1528 = vadd.f32 %v1229, %v1320
    %v1529 = vadd.f32 %v1270, %v1361
    %v1531 = vsel %vm403, %v1527, 0
    %1533 = vmatpush.msra.mxu0 0.0
    %1534 = vmatpush.msra.mxu0 0.0
    %1535 = vmatpush.msra.mxu0 0.0
    %1536 = vmatpush.msra.mxu0 0.0
    %1537 = vmatpush.msra.mxu0 0.0
    %1538 = vmatpush.msra.mxu0 0.0
    %1539 = vmatpush.msra.mxu0 0.0
    %1540 = vmatpush.msra.mxu0 0.0
    %1541 = vmatpush.msra.mxu0 %v1173
    %1542 = vmatpush.msra.mxu0 %v1171
    %1543 = vmatpush.msra.mxu0 %v1169
    %1544 = vmatpush.msra.mxu0 %v1167
    %1545 = vmatpush.msra.mxu0 %v1165
    %1546 = vmatpush.msra.mxu0 %v1163
    %1547 = vmatpush.msra.mxu0 %v1161
    %1548 = vmatpush.msra.mxu0 %v1159
    %1549 = vmatmul.f32.gmra.mxu0 %v1531
    %v1550 = vpop.f32.mrf.mxu0
    %v1551 = vadd.f32 %v1528, %v1550
    %1552 = vdwg.mxu0
    %1553 = vmatpush.msra.mxu0 0.0
    %1554 = vmatpush.msra.mxu0 0.0
    %1555 = vmatpush.msra.mxu0 0.0
    %1556 = vmatpush.msra.mxu0 0.0
    %1557 = vmatpush.msra.mxu0 0.0
    %1558 = vmatpush.msra.mxu0 0.0
    %1559 = vmatpush.msra.mxu0 0.0
    %1560 = vmatpush.msra.mxu0 0.0
    %1561 = vmatpush.msra.mxu0 %v1174
    %1562 = vmatpush.msra.mxu0 %v1172
    %1563 = vmatpush.msra.mxu0 %v1170
    %1564 = vmatpush.msra.mxu0 %v1168
    %1565 = vmatpush.msra.mxu0 %v1166
    %1566 = vmatpush.msra.mxu0 %v1164
    %1567 = vmatpush.msra.mxu0 %v1162
    %1568 = vmatpush.msra.mxu0 %v1160
    %1569 = vmatmul.f32.gmra.mxu0 %v1531
    %v1570 = vpop.f32.mrf.mxu0
    %v1571 = vadd.f32 %v1529, %v1570
    %1572 = vdwg.mxu0
    %v1573 = vxor.u32 %v1551, 2147483648
    %v1574 = vxor.u32 %v1571, 2147483648
    %v1575 = vmul.f32 %v1573, 1.442695
    %v1576 = vpow.pop %v1575
    %v1577 = vmul.f32 %v1574, 1.442695
    %v1578 = vpow.pop %v1577
    %v1579 = vadd.f32 %v1576, 1.0
    %v1580 = vadd.f32 %v1578, 1.0
    %v1581 = vrcp.pop %v1579
    %v1582 = vmul.f32 %v1579, %v1581
    %v1583 = vsub.f32 1.0, %v1582
    %v1584 = vmul.f32 %v1581, %v1583
    %v1585 = vadd.f32 %v1581, %v1584
    %vm1586 = vweird.f32 %v1579
    %vm1587 = vweird.f32 %v1581
    %vm1588 = vmor %vm1586, %vm1587
    %v1589 = vsel %vm1588, %v1581, %v1585
    %v1590 = vand.u32 2147483647, %v1579
    %vm1591 = vcmp.eq.f32.partialorder %v1590, 8.507059e+37
    %v1592 = vand.u32 %v1579, 2147483648
    %v1593 = vor.u32 1.1754944e-38, %v1592
    %v1594 = vsel %vm1591, %v1593, %v1589
    %v1595 = vmul.f32 1.0, %v1594
    %v1596 = vrcp.pop %v1580
    %v1597 = vmul.f32 %v1580, %v1596
    %v1598 = vsub.f32 1.0, %v1597
    %v1599 = vmul.f32 %v1596, %v1598
    %v1600 = vadd.f32 %v1596, %v1599
    %vm1601 = vweird.f32 %v1580
    %vm1602 = vweird.f32 %v1596
    %vm1603 = vmor %vm1601, %vm1602
    %v1604 = vsel %vm1603, %v1596, %v1600
    %v1605 = vand.u32 2147483647, %v1580
    %vm1606 = vcmp.eq.f32.partialorder %v1605, 8.507059e+37
    %v1607 = vand.u32 %v1580, 2147483648
    %v1608 = vor.u32 1.1754944e-38, %v1607
    %v1609 = vsel %vm1606, %v1608, %v1604
    %v1610 = vmul.f32 1.0, %v1609
    %v1611 = vtanh.pop %v1571
    %v1612 = vmul.f32 %v1595, %v1521
    %1614 = vrot.lane.b32.xlu0 %v1611, 64
    %v1615 = vpop.permute.xlu0 %1614
    %v1617 = vmul.f32 %v1595, %v1615
    %1619 = vrot.lane.b32.xlu0 %v1617, 64
    %v1620 = vpop.permute.xlu0 %1619
    %v1622 = vadd.f32 %v1612, %v1620
    %v1623 = vtanh.pop %v1622
    %1625 = vrot.lane.b32.xlu0 %v1623, 64
    %v1626 = vpop.permute.xlu0 %1625
    %v1628 = vmul.f32 %v1610, %v1626
    %v1629 = vadd.f32 %v1232, %v1317
    %v1630 = vadd.f32 %v1273, %v1358
    %v1632 = vsel %vm403, %v1628, 0
    %1634 = vmatpush.msra.mxu0 0.0
    %1635 = vmatpush.msra.mxu0 0.0
    %1636 = vmatpush.msra.mxu0 0.0
    %1637 = vmatpush.msra.mxu0 0.0
    %1638 = vmatpush.msra.mxu0 0.0
    %1639 = vmatpush.msra.mxu0 0.0
    %1640 = vmatpush.msra.mxu0 0.0
    %1641 = vmatpush.msra.mxu0 0.0
    %1642 = vmatpush.msra.mxu0 %v1173
    %1643 = vmatpush.msra.mxu0 %v1171
    %1644 = vmatpush.msra.mxu0 %v1169
    %1645 = vmatpush.msra.mxu0 %v1167
    %1646 = vmatpush.msra.mxu0 %v1165
    %1647 = vmatpush.msra.mxu0 %v1163
    %1648 = vmatpush.msra.mxu0 %v1161
    %1649 = vmatpush.msra.mxu0 %v1159
    %1650 = vmatmul.f32.gmra.mxu0 %v1632
    %v1651 = vpop.f32.mrf.mxu0
    %v1652 = vadd.f32 %v1629, %v1651
    %1653 = vdwg.mxu0
    %1654 = vmatpush.msra.mxu0 0.0
    %1655 = vmatpush.msra.mxu0 0.0
    %1656 = vmatpush.msra.mxu0 0.0
    %1657 = vmatpush.msra.mxu0 0.0
    %1658 = vmatpush.msra.mxu0 0.0
    %1659 = vmatpush.msra.mxu0 0.0
    %1660 = vmatpush.msra.mxu0 0.0
    %1661 = vmatpush.msra.mxu0 0.0
    %1662 = vmatpush.msra.mxu0 %v1174
    %1663 = vmatpush.msra.mxu0 %v1172
    %1664 = vmatpush.msra.mxu0 %v1170
    %1665 = vmatpush.msra.mxu0 %v1168
    %1666 = vmatpush.msra.mxu0 %v1166
    %1667 = vmatpush.msra.mxu0 %v1164
    %1668 = vmatpush.msra.mxu0 %v1162
    %1669 = vmatpush.msra.mxu0 %v1160
    %1670 = vmatmul.f32.gmra.mxu0 %v1632
    %v1671 = vpop.f32.mrf.mxu0
    %v1672 = vadd.f32 %v1630, %v1671
    %1673 = vdwg.mxu0
    %v1674 = vxor.u32 %v1652, 2147483648
    %v1675 = vxor.u32 %v1672, 2147483648
    %v1676 = vmul.f32 %v1674, 1.442695
    %v1677 = vpow.pop %v1676
    %v1678 = vmul.f32 %v1675, 1.442695
    %v1679 = vpow.pop %v1678
    %v1680 = vadd.f32 %v1677, 1.0
    %v1681 = vadd.f32 %v1679, 1.0
    %v1682 = vrcp.pop %v1680
    %v1683 = vmul.f32 %v1680, %v1682
    %v1684 = vsub.f32 1.0, %v1683
    %v1685 = vmul.f32 %v1682, %v1684
    %v1686 = vadd.f32 %v1682, %v1685
    %vm1687 = vweird.f32 %v1680
    %vm1688 = vweird.f32 %v1682
    %vm1689 = vmor %vm1687, %vm1688
    %v1690 = vsel %vm1689, %v1682, %v1686
    %v1691 = vand.u32 2147483647, %v1680
    %vm1692 = vcmp.eq.f32.partialorder %v1691, 8.507059e+37
    %v1693 = vand.u32 %v1680, 2147483648
    %v1694 = vor.u32 1.1754944e-38, %v1693
    %v1695 = vsel %vm1692, %v1694, %v1690
    %v1696 = vmul.f32 1.0, %v1695
    %v1697 = vrcp.pop %v1681
    %v1698 = vmul.f32 %v1681, %v1697
    %v1699 = vsub.f32 1.0, %v1698
    %v1700 = vmul.f32 %v1697, %v1699
    %v1701 = vadd.f32 %v1697, %v1700
    %vm1702 = vweird.f32 %v1681
    %vm1703 = vweird.f32 %v1697
    %vm1704 = vmor %vm1702, %vm1703
    %v1705 = vsel %vm1704, %v1697, %v1701
    %v1706 = vand.u32 2147483647, %v1681
    %vm1707 = vcmp.eq.f32.partialorder %v1706, 8.507059e+37
    %v1708 = vand.u32 %v1681, 2147483648
    %v1709 = vor.u32 1.1754944e-38, %v1708
    %v1710 = vsel %vm1707, %v1709, %v1705
    %v1711 = vmul.f32 1.0, %v1710
    %v1712 = vtanh.pop %v1672
    %v1713 = vmul.f32 %v1696, %v1622
    %1715 = vrot.lane.b32.xlu0 %v1712, 64
    %v1716 = vpop.permute.xlu0 %1715
    %v1718 = vmul.f32 %v1696, %v1716
    %1720 = vrot.lane.b32.xlu0 %v1718, 64
    %v1721 = vpop.permute.xlu0 %1720
    %v1723 = vadd.f32 %v1713, %v1721
    %v1724 = vtanh.pop %v1723
    %1726 = vrot.lane.b32.xlu0 %v1724, 64
    %v1727 = vpop.permute.xlu0 %1726
    %v1729 = vmul.f32 %v1711, %v1727
    %v1730 = vadd.f32 %v1235, %v1314
    %v1731 = vadd.f32 %v1276, %v1355
    %v1733 = vsel %vm403, %v1729, 0
    %1735 = vmatpush.msra.mxu0 0.0
    %1736 = vmatpush.msra.mxu0 0.0
    %1737 = vmatpush.msra.mxu0 0.0
    %1738 = vmatpush.msra.mxu0 0.0
    %1739 = vmatpush.msra.mxu0 0.0
    %1740 = vmatpush.msra.mxu0 0.0
    %1741 = vmatpush.msra.mxu0 0.0
    %1742 = vmatpush.msra.mxu0 0.0
    %1743 = vmatpush.msra.mxu0 %v1173
    %1744 = vmatpush.msra.mxu0 %v1171
    %1745 = vmatpush.msra.mxu0 %v1169
    %1746 = vmatpush.msra.mxu0 %v1167
    %1747 = vmatpush.msra.mxu0 %v1165
    %1748 = vmatpush.msra.mxu0 %v1163
    %1749 = vmatpush.msra.mxu0 %v1161
    %1750 = vmatpush.msra.mxu0 %v1159
    %1751 = vmatmul.f32.gmra.mxu0 %v1733
    %v1752 = vpop.f32.mrf.mxu0
    %v1753 = vadd.f32 %v1730, %v1752
    %1754 = vdwg.mxu0
    %1755 = vmatpush.msra.mxu0 0.0
    %1756 = vmatpush.msra.mxu0 0.0
    %1757 = vmatpush.msra.mxu0 0.0
    %1758 = vmatpush.msra.mxu0 0.0
    %1759 = vmatpush.msra.mxu0 0.0
    %1760 = vmatpush.msra.mxu0 0.0
    %1761 = vmatpush.msra.mxu0 0.0
    %1762 = vmatpush.msra.mxu0 0.0
    %1763 = vmatpush.msra.mxu0 %v1174
    %1764 = vmatpush.msra.mxu0 %v1172
    %1765 = vmatpush.msra.mxu0 %v1170
    %1766 = vmatpush.msra.mxu0 %v1168
    %1767 = vmatpush.msra.mxu0 %v1166
    %1768 = vmatpush.msra.mxu0 %v1164
    %1769 = vmatpush.msra.mxu0 %v1162
    %1770 = vmatpush.msra.mxu0 %v1160
    %1771 = vmatmul.f32.gmra.mxu0 %v1733
    %v1772 = vpop.f32.mrf.mxu0
    %v1773 = vadd.f32 %v1731, %v1772
    %1774 = vdwg.mxu0
    %v1775 = vxor.u32 %v1753, 2147483648
    %v1776 = vxor.u32 %v1773, 2147483648
    %v1777 = vmul.f32 %v1775, 1.442695
    %v1778 = vpow.pop %v1777
    %v1779 = vmul.f32 %v1776, 1.442695
    %v1780 = vpow.pop %v1779
    %v1781 = vadd.f32 %v1778, 1.0
    %v1782 = vadd.f32 %v1780, 1.0
    %v1783 = vrcp.pop %v1781
    %v1784 = vmul.f32 %v1781, %v1783
    %v1785 = vsub.f32 1.0, %v1784
    %v1786 = vmul.f32 %v1783, %v1785
    %v1787 = vadd.f32 %v1783, %v1786
    %vm1788 = vweird.f32 %v1781
    %vm1789 = vweird.f32 %v1783
    %vm1790 = vmor %vm1788, %vm1789
    %v1791 = vsel %vm1790, %v1783, %v1787
    %v1792 = vand.u32 2147483647, %v1781
    %vm1793 = vcmp.eq.f32.partialorder %v1792, 8.507059e+37
    %v1794 = vand.u32 %v1781, 2147483648
    %v1795 = vor.u32 1.1754944e-38, %v1794
    %v1796 = vsel %vm1793, %v1795, %v1791
    %v1797 = vmul.f32 1.0, %v1796
    %v1798 = vrcp.pop %v1782
    %v1799 = vmul.f32 %v1782, %v1798
    %v1800 = vsub.f32 1.0, %v1799
    %v1801 = vmul.f32 %v1798, %v1800
    %v1802 = vadd.f32 %v1798, %v1801
    %vm1803 = vweird.f32 %v1782
    %vm1804 = vweird.f32 %v1798
    %vm1805 = vmor %vm1803, %vm1804
    %v1806 = vsel %vm1805, %v1798, %v1802
    %v1807 = vand.u32 2147483647, %v1782
    %vm1808 = vcmp.eq.f32.partialorder %v1807, 8.507059e+37
    %v1809 = vand.u32 %v1782, 2147483648
    %v1810 = vor.u32 1.1754944e-38, %v1809
    %v1811 = vsel %vm1808, %v1810, %v1806
    %v1812 = vmul.f32 1.0, %v1811
    %v1813 = vtanh.pop %v1773
    %v1814 = vmul.f32 %v1797, %v1723
    %1816 = vrot.lane.b32.xlu0 %v1813, 64
    %v1817 = vpop.permute.xlu0 %1816
    %v1819 = vmul.f32 %v1797, %v1817
    %1821 = vrot.lane.b32.xlu0 %v1819, 64
    %v1822 = vpop.permute.xlu0 %1821
    %v1824 = vadd.f32 %v1814, %v1822
    %v1825 = vtanh.pop %v1824
    %1827 = vrot.lane.b32.xlu0 %v1825, 64
    %v1828 = vpop.permute.xlu0 %1827
    %v1830 = vmul.f32 %v1812, %v1828
    %v1831 = vadd.f32 %v1238, %v1311
    %v1832 = vadd.f32 %v1279, %v1352
    %v1834 = vsel %vm403, %v1830, 0
    %1836 = vmatpush.msra.mxu0 0.0
    %1837 = vmatpush.msra.mxu0 0.0
    %1838 = vmatpush.msra.mxu0 0.0
    %1839 = vmatpush.msra.mxu0 0.0
    %1840 = vmatpush.msra.mxu0 0.0
    %1841 = vmatpush.msra.mxu0 0.0
    %1842 = vmatpush.msra.mxu0 0.0
    %1843 = vmatpush.msra.mxu0 0.0
    %1844 = vmatpush.msra.mxu0 %v1173
    %1845 = vmatpush.msra.mxu0 %v1171
    %1846 = vmatpush.msra.mxu0 %v1169
    %1847 = vmatpush.msra.mxu0 %v1167
    %1848 = vmatpush.msra.mxu0 %v1165
    %1849 = vmatpush.msra.mxu0 %v1163
    %1850 = vmatpush.msra.mxu0 %v1161
    %1851 = vmatpush.msra.mxu0 %v1159
    %1852 = vmatmul.f32.gmra.mxu0 %v1834
    %v1853 = vpop.f32.mrf.mxu0
    %v1854 = vadd.f32 %v1831, %v1853
    %1855 = vdwg.mxu0
    %1856 = vmatpush.msra.mxu0 0.0
    %1857 = vmatpush.msra.mxu0 0.0
    %1858 = vmatpush.msra.mxu0 0.0
    %1859 = vmatpush.msra.mxu0 0.0
    %1860 = vmatpush.msra.mxu0 0.0
    %1861 = vmatpush.msra.mxu0 0.0
    %1862 = vmatpush.msra.mxu0 0.0
    %1863 = vmatpush.msra.mxu0 0.0
    %1864 = vmatpush.msra.mxu0 %v1174
    %1865 = vmatpush.msra.mxu0 %v1172
    %1866 = vmatpush.msra.mxu0 %v1170
    %1867 = vmatpush.msra.mxu0 %v1168
    %1868 = vmatpush.msra.mxu0 %v1166
    %1869 = vmatpush.msra.mxu0 %v1164
    %1870 = vmatpush.msra.mxu0 %v1162
    %1871 = vmatpush.msra.mxu0 %v1160
    %1872 = vmatmul.f32.gmra.mxu0 %v1834
    %v1873 = vpop.f32.mrf.mxu0
    %v1874 = vadd.f32 %v1832, %v1873
    %1875 = vdwg.mxu0
    %v1876 = vxor.u32 %v1854, 2147483648
    %v1877 = vxor.u32 %v1874, 2147483648
    %v1878 = vmul.f32 %v1876, 1.442695
    %v1879 = vpow.pop %v1878
    %v1880 = vmul.f32 %v1877, 1.442695
    %v1881 = vpow.pop %v1880
    %v1882 = vadd.f32 %v1879, 1.0
    %v1883 = vadd.f32 %v1881, 1.0
    %v1884 = vrcp.pop %v1882
    %v1885 = vmul.f32 %v1882, %v1884
    %v1886 = vsub.f32 1.0, %v1885
    %v1887 = vmul.f32 %v1884, %v1886
    %v1888 = vadd.f32 %v1884, %v1887
    %vm1889 = vweird.f32 %v1882
    %vm1890 = vweird.f32 %v1884
    %vm1891 = vmor %vm1889, %vm1890
    %v1892 = vsel %vm1891, %v1884, %v1888
    %v1893 = vand.u32 2147483647, %v1882
    %vm1894 = vcmp.eq.f32.partialorder %v1893, 8.507059e+37
    %v1895 = vand.u32 %v1882, 2147483648
    %v1896 = vor.u32 1.1754944e-38, %v1895
    %v1897 = vsel %vm1894, %v1896, %v1892
    %v1898 = vmul.f32 1.0, %v1897
    %v1899 = vrcp.pop %v1883
    %v1900 = vmul.f32 %v1883, %v1899
    %v1901 = vsub.f32 1.0, %v1900
    %v1902 = vmul.f32 %v1899, %v1901
    %v1903 = vadd.f32 %v1899, %v1902
    %vm1904 = vweird.f32 %v1883
    %vm1905 = vweird.f32 %v1899
    %vm1906 = vmor %vm1904, %vm1905
    %v1907 = vsel %vm1906, %v1899, %v1903
    %v1908 = vand.u32 2147483647, %v1883
    %vm1909 = vcmp.eq.f32.partialorder %v1908, 8.507059e+37
    %v1910 = vand.u32 %v1883, 2147483648
    %v1911 = vor.u32 1.1754944e-38, %v1910
    %v1912 = vsel %vm1909, %v1911, %v1907
    %v1913 = vmul.f32 1.0, %v1912
    %v1914 = vtanh.pop %v1874
    %v1915 = vmul.f32 %v1898, %v1824
    %1917 = vrot.lane.b32.xlu0 %v1914, 64
    %v1918 = vpop.permute.xlu0 %1917
    %v1920 = vmul.f32 %v1898, %v1918
    %1922 = vrot.lane.b32.xlu0 %v1920, 64
    %v1923 = vpop.permute.xlu0 %1922
    %v1925 = vadd.f32 %v1915, %v1923
    %v1926 = vtanh.pop %v1925
    %1928 = vrot.lane.b32.xlu0 %v1926, 64
    %v1929 = vpop.permute.xlu0 %1928
    %v1931 = vmul.f32 %v1913, %v1929
    %v1932 = vadd.f32 %v1241, %v1308
    %v1933 = vadd.f32 %v1282, %v1349
    %v1935 = vsel %vm403, %v1931, 0
    %1937 = vmatpush.msra.mxu0 0.0
    %1938 = vmatpush.msra.mxu0 0.0
    %1939 = vmatpush.msra.mxu0 0.0
    %1940 = vmatpush.msra.mxu0 0.0
    %1941 = vmatpush.msra.mxu0 0.0
    %1942 = vmatpush.msra.mxu0 0.0
    %1943 = vmatpush.msra.mxu0 0.0
    %1944 = vmatpush.msra.mxu0 0.0
    %1945 = vmatpush.msra.mxu0 %v1173
    %1946 = vmatpush.msra.mxu0 %v1171
    %1947 = vmatpush.msra.mxu0 %v1169
    %1948 = vmatpush.msra.mxu0 %v1167
    %1949 = vmatpush.msra.mxu0 %v1165
    %1950 = vmatpush.msra.mxu0 %v1163
    %1951 = vmatpush.msra.mxu0 %v1161
    %1952 = vmatpush.msra.mxu0 %v1159
    %1953 = vmatmul.f32.gmra.mxu0 %v1935
    %v1954 = vpop.f32.mrf.mxu0
    %v1955 = vadd.f32 %v1932, %v1954
    %1956 = vdwg.mxu0
    %1957 = vmatpush.msra.mxu0 0.0
    %1958 = vmatpush.msra.mxu0 0.0
    %1959 = vmatpush.msra.mxu0 0.0
    %1960 = vmatpush.msra.mxu0 0.0
    %1961 = vmatpush.msra.mxu0 0.0
    %1962 = vmatpush.msra.mxu0 0.0
    %1963 = vmatpush.msra.mxu0 0.0
    %1964 = vmatpush.msra.mxu0 0.0
    %1965 = vmatpush.msra.mxu0 %v1174
    %1966 = vmatpush.msra.mxu0 %v1172
    %1967 = vmatpush.msra.mxu0 %v1170
    %1968 = vmatpush.msra.mxu0 %v1168
    %1969 = vmatpush.msra.mxu0 %v1166
    %1970 = vmatpush.msra.mxu0 %v1164
    %1971 = vmatpush.msra.mxu0 %v1162
    %1972 = vmatpush.msra.mxu0 %v1160
    %1973 = vmatmul.f32.gmra.mxu0 %v1935
    %v1974 = vpop.f32.mrf.mxu0
    %v1975 = vadd.f32 %v1933, %v1974
    %1976 = vdwg.mxu0
    %v1977 = vxor.u32 %v1955, 2147483648
    %v1978 = vxor.u32 %v1975, 2147483648
    %v1979 = vmul.f32 %v1977, 1.442695
    %v1980 = vpow.pop %v1979
    %v1981 = vmul.f32 %v1978, 1.442695
    %v1982 = vpow.pop %v1981
    %v1983 = vadd.f32 %v1980, 1.0
    %v1984 = vadd.f32 %v1982, 1.0
    %v1985 = vrcp.pop %v1983
    %v1986 = vmul.f32 %v1983, %v1985
    %v1987 = vsub.f32 1.0, %v1986
    %v1988 = vmul.f32 %v1985, %v1987
    %v1989 = vadd.f32 %v1985, %v1988
    %vm1990 = vweird.f32 %v1983
    %vm1991 = vweird.f32 %v1985
    %vm1992 = vmor %vm1990, %vm1991
    %v1993 = vsel %vm1992, %v1985, %v1989
    %v1994 = vand.u32 2147483647, %v1983
    %vm1995 = vcmp.eq.f32.partialorder %v1994, 8.507059e+37
    %v1996 = vand.u32 %v1983, 2147483648
    %v1997 = vor.u32 1.1754944e-38, %v1996
    %v1998 = vsel %vm1995, %v1997, %v1993
    %v1999 = vmul.f32 1.0, %v1998
    %v2000 = vrcp.pop %v1984
    %v2001 = vmul.f32 %v1984, %v2000
    %v2002 = vsub.f32 1.0, %v2001
    %v2003 = vmul.f32 %v2000, %v2002
    %v2004 = vadd.f32 %v2000, %v2003
    %vm2005 = vweird.f32 %v1984
    %vm2006 = vweird.f32 %v2000
    %vm2007 = vmor %vm2005, %vm2006
    %v2008 = vsel %vm2007, %v2000, %v2004
    %v2009 = vand.u32 2147483647, %v1984
    %vm2010 = vcmp.eq.f32.partialorder %v2009, 8.507059e+37
    %v2011 = vand.u32 %v1984, 2147483648
    %v2012 = vor.u32 1.1754944e-38, %v2011
    %v2013 = vsel %vm2010, %v2012, %v2008
    %v2014 = vmul.f32 1.0, %v2013
    %v2015 = vtanh.pop %v1975
    %v2016 = vmul.f32 %v1999, %v1925
    %2018 = vrot.lane.b32.xlu0 %v2015, 64
    %v2019 = vpop.permute.xlu0 %2018
    %v2021 = vmul.f32 %v1999, %v2019
    %2023 = vrot.lane.b32.xlu0 %v2021, 64
    %v2024 = vpop.permute.xlu0 %2023
    %v2026 = vadd.f32 %v2016, %v2024
    %v2027 = vtanh.pop %v2026
    %2029 = vrot.lane.b32.xlu0 %v2027, 64
    %v2030 = vpop.permute.xlu0 %2029
    %v2032 = vmul.f32 %v2014, %v2030
    %v2033 = vadd.f32 %v1244, %v1305
    %v2034 = vadd.f32 %v1285, %v1346
    %v2036 = vsel %vm403, %v2032, 0
    %2038 = vmatpush.msra.mxu0 0.0
    %2039 = vmatpush.msra.mxu0 0.0
    %2040 = vmatpush.msra.mxu0 0.0
    %2041 = vmatpush.msra.mxu0 0.0
    %2042 = vmatpush.msra.mxu0 0.0
    %2043 = vmatpush.msra.mxu0 0.0
    %2044 = vmatpush.msra.mxu0 0.0
    %2045 = vmatpush.msra.mxu0 0.0
    %2046 = vmatpush.msra.mxu0 %v1173
    %2047 = vmatpush.msra.mxu0 %v1171
    %2048 = vmatpush.msra.mxu0 %v1169
    %2049 = vmatpush.msra.mxu0 %v1167
    %2050 = vmatpush.msra.mxu0 %v1165
    %2051 = vmatpush.msra.mxu0 %v1163
    %2052 = vmatpush.msra.mxu0 %v1161
    %2053 = vmatpush.msra.mxu0 %v1159
    %2054 = vmatmul.f32.gmra.mxu0 %v2036
    %v2055 = vpop.f32.mrf.mxu0
    %v2056 = vadd.f32 %v2033, %v2055
    %2057 = vdwg.mxu0
    %2058 = vmatpush.msra.mxu0 0.0
    %2059 = vmatpush.msra.mxu0 0.0
    %2060 = vmatpush.msra.mxu0 0.0
    %2061 = vmatpush.msra.mxu0 0.0
    %2062 = vmatpush.msra.mxu0 0.0
    %2063 = vmatpush.msra.mxu0 0.0
    %2064 = vmatpush.msra.mxu0 0.0
    %2065 = vmatpush.msra.mxu0 0.0
    %2066 = vmatpush.msra.mxu0 %v1174
    %2067 = vmatpush.msra.mxu0 %v1172
    %2068 = vmatpush.msra.mxu0 %v1170
    %2069 = vmatpush.msra.mxu0 %v1168
    %2070 = vmatpush.msra.mxu0 %v1166
    %2071 = vmatpush.msra.mxu0 %v1164
    %2072 = vmatpush.msra.mxu0 %v1162
    %2073 = vmatpush.msra.mxu0 %v1160
    %2074 = vmatmul.f32.gmra.mxu0 %v2036
    %v2075 = vpop.f32.mrf.mxu0
    %v2076 = vadd.f32 %v2034, %v2075
    %2077 = vdwg.mxu0
    %v2078 = vxor.u32 %v2056, 2147483648
    %v2079 = vxor.u32 %v2076, 2147483648
    %v2080 = vmul.f32 %v2078, 1.442695
    %v2081 = vpow.pop %v2080
    %v2082 = vmul.f32 %v2079, 1.442695
    %v2083 = vpow.pop %v2082
    %v2084 = vadd.f32 %v2081, 1.0
    %v2085 = vadd.f32 %v2083, 1.0
    %v2086 = vrcp.pop %v2084
    %v2087 = vmul.f32 %v2084, %v2086
    %v2088 = vsub.f32 1.0, %v2087
    %v2089 = vmul.f32 %v2086, %v2088
    %v2090 = vadd.f32 %v2086, %v2089
    %vm2091 = vweird.f32 %v2084
    %vm2092 = vweird.f32 %v2086
    %vm2093 = vmor %vm2091, %vm2092
    %v2094 = vsel %vm2093, %v2086, %v2090
    %v2095 = vand.u32 2147483647, %v2084
    %vm2096 = vcmp.eq.f32.partialorder %v2095, 8.507059e+37
    %v2097 = vand.u32 %v2084, 2147483648
    %v2098 = vor.u32 1.1754944e-38, %v2097
    %v2099 = vsel %vm2096, %v2098, %v2094
    %v2100 = vmul.f32 1.0, %v2099
    %v2101 = vrcp.pop %v2085
    %v2102 = vmul.f32 %v2085, %v2101
    %v2103 = vsub.f32 1.0, %v2102
    %v2104 = vmul.f32 %v2101, %v2103
    %v2105 = vadd.f32 %v2101, %v2104
    %vm2106 = vweird.f32 %v2085
    %vm2107 = vweird.f32 %v2101
    %vm2108 = vmor %vm2106, %vm2107
    %v2109 = vsel %vm2108, %v2101, %v2105
    %v2110 = vand.u32 2147483647, %v2085
    %vm2111 = vcmp.eq.f32.partialorder %v2110, 8.507059e+37
    %v2112 = vand.u32 %v2085, 2147483648
    %v2113 = vor.u32 1.1754944e-38, %v2112
    %v2114 = vsel %vm2111, %v2113, %v2109
    %v2115 = vmul.f32 1.0, %v2114
    %v2116 = vtanh.pop %v2076
    %v2117 = vmul.f32 %v2100, %v2026
    %2119 = vrot.lane.b32.xlu0 %v2116, 64
    %v2120 = vpop.permute.xlu0 %2119
    %v2122 = vmul.f32 %v2100, %v2120
    %2124 = vrot.lane.b32.xlu0 %v2122, 64
    %v2125 = vpop.permute.xlu0 %2124
    %v2127 = vadd.f32 %v2117, %v2125
    %v2128 = vtanh.pop %v2127
    %2130 = vrot.lane.b32.xlu0 %v2128, 64
    %v2131 = vpop.permute.xlu0 %2130
    %v2133 = vmul.f32 %v2115, %v2131
    %v2134 = vld [vmem:[%s9] sm:$0x1]
    %v2136 = vperm.slane %v2134, 0
    %v2138 = vmul.f32 %v2133, %v2136
    %vm2139 = vcmask 261120
    %v2140 = vsel %vm2139, %v2138, 0.0
    %2141 = vadd.xlane.f32.xlu0 %v2140
    %v2142 = vpop.xlane.xlu0 %2141
    %v2143 = vmul.f32 %v1426, %v2136
    %2145 = vrot.lane.b32.xlu0 %v2143, 96
    %v2146 = vpop.permute.xlu0 %2145
    %v2148 = vsel %vm2139, %v2146, 0.0
    %2149 = vadd.xlane.f32.xlu0 %v2148
    %v2150 = vpop.xlane.xlu0 %2149
    %v2151 = vadd.f32 %v2142, %v2150
    %v2152 = vld [vmem:[#allocation3] sm:$0x1]
    %v2154 = vperm.slane %v2152, 0
    %v2156 = vadd.f32 %v2151, %v2154
    %vm2157 = vcmask 7168
    %2158 = vst.msk [vmem:[%s11] sm:$0xff] %vm2157, %v2156
    // Predicated region
    $region66: #{lstm_forward.1} parent=1 // pred_check
      _
    $region67: #{lstm_forward.1} parent=1 // pred_check_branch
      %2160 = sbr.rel (0) target = $region69
    $region68: #{lstm_forward.1} parent=1 // pred_region
      _
    $region69: #{lstm_forward.1} parent=1 // pred_fallthru
      _
    // Predicated region
    $region70: #{lstm_forward.1} parent=1 // pred_check
      _
    $region71: #{lstm_forward.1} parent=1 // pred_check_branch
      %2162 = sbr.rel (0) target = $region73
    $region72: #{lstm_forward.1} parent=1 // pred_region
      _
    $region73: #{lstm_forward.1} parent=1 // pred_fallthru
      _
    %2163 = vsyncpa [#allocation5], 1
    %2164 = vsyncpa [#allocation7], 1
    %2165 = vsyncpa [#allocation10], 1

</llo_original>
